<compile_context>
chip_gen: v6e
topology: v6e:2x2x1
jax: 0.10.0
libtpu: 0.0.40
codegen_flags: <defaults>
</compile_context>

<pallas_src>
import jax
import jax.numpy as jnp
from jax import lax
from jax.experimental import pallas as pl
from jax.experimental.pallas import tpu as pltpu

NEG_SLOPE = 0.01   # PyTorch nn.LeakyReLU default
BN_EPS = 1e-5      # PyTorch nn.BatchNorm2d default


def _round_up(x, m):
    return ((x + m - 1) // m) * m


# ----------------------------------------------------------------------------
# Fused shifted-window conv kernel (no im2col):
#   out = epilogue( sum_i sum_t  X_i[off_t : off_t + M, :] @ W_i[t] )
# X_i is the spatially padded, W-padded, flattened NHWC input of operand i,
# W_i is its (T=KH*KW, Cin_i_pad, N_pad) weight stack.  Offsets are static.
# ----------------------------------------------------------------------------
def _make_conv_kernel(*, n_inputs, taps, m_out, apply_act, has_res,
                      apply_softmax, valid_n):
    def kernel(*refs):
        x_refs = refs[:n_inputs]
        w_refs = refs[n_inputs:2 * n_inputs]
        prm_ref = refs[2 * n_inputs]
        res_ref = refs[2 * n_inputs + 1] if has_res else None
        o_ref = refs[-1]

        acc = None
        for i in range(n_inputs):
            for t, off in enumerate(taps):
                a = x_refs[i][off:off + m_out, :]          # static VMEM view
                c = jnp.dot(a, w_refs[i][t],
                            preferred_element_type=jnp.float32)
                acc = c if acc is None else acc + c

        prm = prm_ref[...]                                  # (8, tn) f32
        y = acc
        if apply_act:
            y = y + prm[0:1, :]                             # conv bias (pre-act)
            y = jnp.where(y > 0, y, NEG_SLOPE * y)          # LeakyReLU
        y = y * prm[1:2, :] + prm[2:3, :]                   # BN affine (bias is
                                                            # folded in when no act)
        if has_res:
            y = y + res_ref[...].astype(jnp.float32)
        if apply_softmax:
            col = lax.broadcasted_iota(jnp.int32, y.shape, 1)
            y = jnp.where(col < valid_n, y, -1e30)          # mask N padding
            y = y - jnp.max(y, axis=-1, keepdims=True)
            e = jnp.exp(y)
            y = e / jnp.sum(e, axis=-1, keepdims=True)
        o_ref[...] = y.astype(o_ref.dtype)

    return kernel


def fused_conv(xs, layer, *, kh, kw, cout, dilation=1, padding=0,
               apply_act=True, res=None, apply_softmax=False,
               out_dtype=jnp.bfloat16):
    """Fused conv + epilogue.  xs: list of NHWC inputs (same B,H,W; channels
    may differ); layer: {'w': [ (T,Cin_i_pad,N_pad) bf16 ], 'prm': (8,N_pad)}."""
    w_list = layer['w']
    prm = layer['prm']
    assert len(xs) == len(w_list)

    B, H, W, _ = xs[0].shape
    d, p = dilation, padding
    Hp, Wp = H + 2 * p, W + 2 * p
    out_h, out_w = Hp - d * (kh - 1), Wp - d * (kw - 1)     # stride-1 convs only

    m_out = _round_up(out_h * Wp, 8)
    taps = tuple(r * d * Wp + c * d for r in range(kh) for c in range(kw))
    m_in = _round_up(taps[-1] + m_out, 8)                   # >= Hp*Wp by construction

    # Build flattened, padded bf16 operands (single pad/cast pass each).
    a_ops = []
    for x, wt in zip(xs, w_list):
        ci_pad = wt.shape[1]
        c_in = x.shape[-1]
        xp = jnp.pad(x.astype(jnp.bfloat16),
                     ((0, 0), (p, p), (p, p), (0, ci_pad - c_in)))
        xf = xp.reshape(B, Hp * Wp, ci_pad)
        xf = jnp.pad(xf, ((0, 0), (0, m_in - Hp * Wp), (0, 0)))
        a_ops.append(xf)

    n_pad = prm.shape[1]
    tn = 256 if n_pad % 256 == 0 else 128                   # fill 256-wide MXU
    if apply_softmax:
        assert n_pad == tn, "softmax epilogue needs a single lane tile"

    has_res = res is not None
    operands = list(a_ops) + list(w_list) + [prm]
    if has_res:
        r = jnp.pad(res.astype(jnp.bfloat16),
                    ((0, 0), (0, 0), (0, Wp - out_w), (0, n_pad - cout)))
        r = r.reshape(B, out_h * Wp, n_pad)
        r = jnp.pad(r, ((0, 0), (0, m_out - out_h * Wp), (0, 0)))
        operands.append(r)

    kernel = _make_conv_kernel(
        n_inputs=len(xs), taps=taps, m_out=m_out, apply_act=apply_act,
        has_res=has_res, apply_softmax=apply_softmax, valid_n=cout)

    x_specs = [pl.BlockSpec((None, m_in, a.shape[-1]), lambda b, j: (b, 0, 0))
               for a in a_ops]
    w_specs = [pl.BlockSpec((w.shape[0], w.shape[1], tn), lambda b, j: (0, 0, j))
               for w in w_list]
    prm_spec = pl.BlockSpec((8, tn), lambda b, j: (0, j))
    o_spec = pl.BlockSpec((None, m_out, tn), lambda b, j: (b, 0, j))
    in_specs = x_specs + w_specs + [prm_spec] + ([o_spec] if has_res else [])

    out = pl.pallas_call(
        kernel,
        out_shape=jax.ShapeDtypeStruct((B, m_out, n_pad), out_dtype),
        grid_spec=pltpu.PrefetchScalarGridSpec(
            num_scalar_prefetch=0,
            grid=(B, n_pad // tn),
            in_specs=in_specs,
            out_specs=o_spec),
        compiler_params=pltpu.CompilerParams(
            dimension_semantics=("parallel", "parallel")),
    )(*operands)

    out = out[:, :out_h * Wp, :cout].reshape(B, out_h, Wp, cout)
    return out[:, :, :out_w, :]


# ----------------------------------------------------------------------------
# Pure-VPU helpers (memory-bound; plain JAX, kept in bf16).
# ----------------------------------------------------------------------------
def avg_pool_3x3_s2_p1(x):
    """AvgPool2d(3, stride=2, padding=1, count_include_pad=True), bf16 in/out
    with f32 accumulation in one fused expression (no f32 materialisation)."""
    B, H, W, C = x.shape
    out_h = (H - 1) // 2 + 1
    out_w = (W - 1) // 2 + 1
    xp = jnp.pad(x, ((0, 0), (1, 1), (1, 1), (0, 0)))
    acc = None
    for r in range(3):
        for c in range(3):
            s = xp[:, r:r + 2 * out_h - 1:2, c:c + 2 * out_w - 1:2, :]
            s = s.astype(jnp.float32)
            acc = s if acc is None else acc + s
    return (acc * (1.0 / 9.0)).astype(x.dtype)


def pixel_shuffle2(x):
    B, H, W, C = x.shape
    co = C // 4
    x = x.reshape(B, H, W, co, 2, 2)
    x = jnp.transpose(x, (0, 1, 4, 2, 5, 3))
    return x.reshape(B, 2 * H, 2 * W, co)


# ----------------------------------------------------------------------------
# One-time parameter preprocessing (weight repack, BN folding, prm packing).
# ----------------------------------------------------------------------------
def prep_conv(w, b, bn=None, *, splits=None, apply_act=True):
    cout, cin, KH, KW = w.shape
    if splits is None:
        splits = [cin]
    n_pad = _round_up(cout, 128)

    if bn is None:
        scale = jnp.ones((cout,), jnp.float32)
        shift = jnp.zeros((cout,), jnp.float32)
    else:
        gamma, beta, mean, var = bn                        # eval-mode BatchNorm
        scale = gamma / jnp.sqrt(var + BN_EPS)
        shift = beta - mean * scale
    bias = b.astype(jnp.float32)
    if not apply_act:                                      # fold bias into BN shift
        shift = shift + bias * scale
        bias = jnp.zeros_like(bias)

    prm = jnp.zeros((8, n_pad), jnp.float32)
    prm = prm.at[0, :cout].set(bias)
    prm = prm.at[1, :cout].set(scale.astype(jnp.float32))
    prm = prm.at[2, :cout].set(shift.astype(jnp.float32))

    w_list = []
    off = 0
    for ci in splits:
        wc = w[:, off:off + ci, :, :]                      # (Cout, ci, KH, KW)
        off += ci
        ci_pad = _round_up(ci, 128)
        wt = jnp.transpose(wc, (2, 3, 1, 0)).reshape(KH * KW, ci, cout)
        wt = jnp.pad(wt, ((0, 0), (0, ci_pad - ci), (0, n_pad - cout)))
        w_list.append(wt.astype(jnp.bfloat16))
    assert off == cin
    return dict(w=w_list, prm=prm)


def preprocess_params(p):
    def ctx(q):
        return dict(c1=prep_conv(q['w1'], q['b1']),
                    c2=prep_conv(q['w2'], q['b2'], bn=q['bn1']),
                    c3=prep_conv(q['w3'], q['b3'], bn=q['bn2']))

    def resb(q):
        cout = q['w1'].shape[0]
        return dict(c1=prep_conv(q['w1'], q['b1']),
                    c2=prep_conv(q['w2'], q['b2'], bn=q['bn1']),
                    c3=prep_conv(q['w3'], q['b3'], bn=q['bn2']),
                    c4=prep_conv(q['w4'], q['b4'], bn=q['bn3']),
                    c5=prep_conv(q['w5'], q['b5'], bn=q['bn4'],
                                 splits=[cout, cout, cout]))

    def upb(q):
        cout = q['w1'].shape[0]
        up_c = q['w1'].shape[1] - 2 * cout
        return dict(c1=prep_conv(q['w1'], q['b1'], bn=q['bn1'],
                                 splits=[up_c, 2 * cout]),
                    c2=prep_conv(q['w2'], q['b2'], bn=q['bn2']),
                    c3=prep_conv(q['w3'], q['b3'], bn=q['bn3']),
                    c4=prep_conv(q['w4'], q['b4'], bn=q['bn4'],
                                 splits=[cout, cout, cout]))

    wl, bl = p['logits']
    return dict(
        downCntx=ctx(p['downCntx']), downCntx2=ctx(p['downCntx2']),
        downCntx3=ctx(p['downCntx3']),
        resBlock1=resb(p['resBlock1']), resBlock2=resb(p['resBlock2']),
        resBlock3=resb(p['resBlock3']), resBlock4=resb(p['resBlock4']),
        resBlock5=resb(p['resBlock5']),
        upBlock1=upb(p['upBlock1']), upBlock2=upb(p['upBlock2']),
        upBlock3=upb(p['upBlock3']), upBlock4=upb(p['upBlock4']),
        logits=prep_conv(wl, bl, apply_act=False))


# ----------------------------------------------------------------------------
# SalsaNext blocks (Dropout2d is identity at inference).
# ----------------------------------------------------------------------------
def res_context_block(x, lp, cout):
    shortcut = fused_conv([x], lp['c1'], kh=1, kw=1, cout=cout)
    resA1 = fused_conv([shortcut], lp['c2'], kh=3, kw=3, padding=1, cout=cout)
    return fused_conv([resA1], lp['c3'], kh=3, kw=3, padding=2, dilation=2,
                      cout=cout, res=shortcut)


def res_block(x, lp, cout, pooling=True):
    shortcut = fused_conv([x], lp['c1'], kh=1, kw=1, cout=cout)
    resA1 = fused_conv([x], lp['c2'], kh=3, kw=3, padding=1, cout=cout)
    resA2 = fused_conv([resA1], lp['c3'], kh=3, kw=3, padding=2, dilation=2,
                       cout=cout)
    resA3 = fused_conv([resA2], lp['c4'], kh=2, kw=2, padding=1, dilation=2,
                       cout=cout)
    # conv5 on cat(resA1,resA2,resA3): concat eliminated, K-split inside kernel.
    resA = fused_conv([resA1, resA2, resA3], lp['c5'], kh=1, kw=1, cout=cout,
                      res=shortcut)
    if pooling:
        return avg_pool_3x3_s2_p1(resA), resA
    return resA


def up_block(x, skip, lp, cout):
    upA = pixel_shuffle2(x)
    # conv1 on cat(upA, skip): concat eliminated.
    upE1 = fused_conv([upA, skip], lp['c1'], kh=3, kw=3, padding=1, cout=cout)
    upE2 = fused_conv([upE1], lp['c2'], kh=3, kw=3, padding=2, dilation=2,
                      cout=cout)
    upE3 = fused_conv([upE2], lp['c3'], kh=2, kw=2, padding=1, dilation=2,
                      cout=cout)
    return fused_conv([upE1, upE2, upE3], lp['c4'], kh=1, kw=1, cout=cout)


def salsanext_forward(x_nchw, prep, nclasses):
    # NCHW input (PyTorch layout); internal NHWC bf16; NCHW f32 softmax output.
    x = jnp.transpose(x_nchw, (0, 2, 3, 1)).astype(jnp.bfloat16)
    d = res_context_block(x, prep['downCntx'], 32)
    d = res_context_block(d, prep['downCntx2'], 32)
    d = res_context_block(d, prep['downCntx3'], 32)
    down0c, down0b = res_block(d, prep['resBlock1'], 64)
    down1c, down1b = res_block(down0c, prep['resBlock2'], 128)
    down2c, down2b = res_block(down1c, prep['resBlock3'], 256)
    down3c, down3b = res_block(down2c, prep['resBlock4'], 256)
    down5c = res_block(down3c, prep['resBlock5'], 256, pooling=False)
    up4e = up_block(down5c, down3b, prep['upBlock1'], 128)
    up3e = up_block(up4e, down2b, prep['upBlock2'], 128)
    up2e = up_block(up3e, down1b, prep['upBlock3'], 64)
    up1e = up_block(up2e, down0b, prep['upBlock4'], 32)
    probs = fused_conv([up1e], prep['logits'], kh=1, kw=1, cout=nclasses,
                       apply_act=False, apply_softmax=True,
                       out_dtype=jnp.float32)
    return jnp.transpose(probs, (0, 3, 1, 2))


# ----------------------------------------------------------------------------
# Deterministic PyTorch-style parameter init (BN at default eval stats).
# ----------------------------------------------------------------------------
class ParamGen:
    def __init__(self, key):
        self.key = key

    def _next(self):
        self.key, k = jax.random.split(self.key)
        return k

    def conv(self, cout, cin, kh, kw):
        fan_in = cin * kh * kw
        bound = 1.0 / (fan_in ** 0.5)
        w = jax.random.uniform(self._next(), (cout, cin, kh, kw),
                               jnp.float32, -bound, bound)
        b = jax.random.uniform(self._next(), (cout,), jnp.float32,
                               -bound, bound)
        return w, b

    @staticmethod
    def bn(c):
        return (jnp.ones((c,), jnp.float32), jnp.zeros((c,), jnp.float32),
                jnp.zeros((c,), jnp.float32), jnp.ones((c,), jnp.float32))


def init_params(key, nclasses):
    pg = ParamGen(key)

    def ctx(cin, cout):
        w1, b1 = pg.conv(cout, cin, 1, 1)
        w2, b2 = pg.conv(cout, cout, 3, 3)
        w3, b3 = pg.conv(cout, cout, 3, 3)
        return dict(w1=w1, b1=b1, w2=w2, b2=b2, w3=w3, b3=b3,
                    bn1=pg.bn(cout), bn2=pg.bn(cout))

    def resb(cin, cout):
        w1, b1 = pg.conv(cout, cin, 1, 1)
        w2, b2 = pg.conv(cout, cin, 3, 3)
        w3, b3 = pg.conv(cout, cout, 3, 3)
        w4, b4 = pg.conv(cout, cout, 2, 2)
        w5, b5 = pg.conv(cout, cout * 3, 1, 1)
        return dict(w1=w1, b1=b1, w2=w2, b2=b2, w3=w3, b3=b3, w4=w4, b4=b4,
                    w5=w5, b5=b5, bn1=pg.bn(cout), bn2=pg.bn(cout),
                    bn3=pg.bn(cout), bn4=pg.bn(cout))

    def upb(cin, cout):
        w1, b1 = pg.conv(cout, cin // 4 + 2 * cout, 3, 3)
        w2, b2 = pg.conv(cout, cout, 3, 3)
        w3, b3 = pg.conv(cout, cout, 2, 2)
        w4, b4 = pg.conv(cout, cout * 3, 1, 1)
        return dict(w1=w1, b1=b1, w2=w2, b2=b2, w3=w3, b3=b3, w4=w4, b4=b4,
                    bn1=pg.bn(cout), bn2=pg.bn(cout), bn3=pg.bn(cout),
                    bn4=pg.bn(cout))

    return dict(
        downCntx=ctx(5, 32), downCntx2=ctx(32, 32), downCntx3=ctx(32, 32),
        resBlock1=resb(32, 64), resBlock2=resb(64, 128),
        resBlock3=resb(128, 256), resBlock4=resb(256, 256),
        resBlock5=resb(256, 256),
        upBlock1=upb(256, 128), upBlock2=upb(128, 128),
        upBlock3=upb(128, 64), upBlock4=upb(64, 32),
        logits=pg.conv(nclasses, 32, 1, 1),
    )


if __name__ == "__main__":
    # --- quick self-check of the shifted-window conv kernel vs lax.conv ------
    kt1, kt2, kt3, kt4 = jax.random.split(jax.random.PRNGKey(1), 4)
    xt = jax.random.normal(kt1, (1, 6, 7, 32), jnp.float32) * 0.5
    wt = jax.random.normal(kt2, (32, 32, 3, 3), jnp.float32) * 0.05
    bt = jax.random.normal(kt3, (32,), jnp.float32) * 0.05
    rt = jax.random.normal(kt4, (1, 6, 7, 32), jnp.float32) * 0.5
    got = fused_conv([xt], prep_conv(wt, bt), kh=3, kw=3, dilation=2,
                     padding=2, cout=32, res=rt).astype(jnp.float32)
    xb = xt.astype(jnp.bfloat16).astype(jnp.float32)
    wb = wt.astype(jnp.bfloat16).astype(jnp.float32)
    ref = lax.conv_general_dilated(
        xb, jnp.transpose(wb, (2, 3, 1, 0)), (1, 1), ((2, 2), (2, 2)),
        rhs_dilation=(2, 2), dimension_numbers=("NHWC", "HWIO", "NHWC"))
    ref = ref + bt[None, None, None, :]
    ref = jnp.where(ref > 0, ref, NEG_SLOPE * ref)
    ref = ref + rt.astype(jnp.bfloat16).astype(jnp.float32)
    assert bool(jnp.max(jnp.abs(got - ref)) < 5e-2), "halo-conv self-check failed"

    # --- full SalsaNextUncertainty forward -----------------------------------
    nclasses = 20
    B, C, H, W = 2, 5, 16, 16            # SalsaNext takes 5 input channels
    key = jax.random.PRNGKey(0)
    kx, kp = jax.random.split(key)
    x = jax.random.normal(kx, (B, C, H, W), jnp.float32)

    raw = init_params(kp, nclasses)
    prep = jax.block_until_ready(jax.jit(preprocess_params)(raw))

    fwd = jax.jit(lambda xx, pp: salsanext_forward(xx, pp, nclasses))
    out = jax.block_until_ready(fwd(x, prep))

    assert out.shape == (B, nclasses, H, W)
    assert bool(jnp.all(jnp.isfinite(out)))
    # softmax over the channel dim sums to 1
    assert bool(jnp.allclose(jnp.sum(out, axis=1), 1.0, atol=1e-4))
    print("KERNEL_OK")
</pallas_src>

<mosaic_0001>
module attributes {stable_mosaic.version = 11 : i64} {
  func.func @kernel(%arg0: i32, %arg1: i32, %arg2: memref<1x120x128xbf16, #tpu.memory_space<vmem>>, %arg3: memref<9x128x128xbf16, #tpu.memory_space<vmem>>, %arg4: memref<8x128xf32, #tpu.memory_space<vmem>>, %arg5: memref<1x72x128xbf16, #tpu.memory_space<vmem>>, %arg6: memref<1x72x128xbf16, #tpu.memory_space<vmem>>) attributes {dimension_semantics = [#tpu.dimension_semantics<parallel>, #tpu.dimension_semantics<parallel>], iteration_bounds = array<i64: 1, 1>, scalar_prefetch = 0 : i64, scratch_operands = 0 : i64, tpu.core_type = #tpu.core_type<tc>, window_params = [{transform_indices = @transform_0, window_bounds = array<i64: 1, 120, 128>}, {transform_indices = @transform_1, window_bounds = array<i64: 9, 128, 128>}, {transform_indices = @transform_2, window_bounds = array<i64: 8, 128>}, {transform_indices = @transform_3, window_bounds = array<i64: 1, 72, 128>}, {transform_indices = @transform_4, window_bounds = array<i64: 1, 72, 128>}]} {
    %c0 = arith.constant 0 : index
    %c0_0 = arith.constant 0 : index
    %c0_1 = arith.constant 0 : index
    %0 = vector.load %arg2[%c0, %c0_0, %c0_1] : memref<1x120x128xbf16, #tpu.memory_space<vmem>>, vector<1x72x128xbf16>
    %1 = vector.shape_cast %0 : vector<1x72x128xbf16> to vector<72x128xbf16>
    %c0_2 = arith.constant 0 : index
    %c0_3 = arith.constant 0 : index
    %c0_4 = arith.constant 0 : index
    %2 = vector.load %arg3[%c0_2, %c0_3, %c0_4] : memref<9x128x128xbf16, #tpu.memory_space<vmem>>, vector<1x128x128xbf16>
    %3 = vector.shape_cast %2 : vector<1x128x128xbf16> to vector<128x128xbf16>
    %cst = arith.constant dense<0.000000e+00> : vector<72x128xf32>
    %4 = tpu.matmul %1, %3, %cst {dimension_numbers = #tpu.dot_dimension_numbers<[1], [0], [0], [1], [0, 0, 1, 1], [], []>} : vector<72x128xbf16>, vector<128x128xbf16>, vector<72x128xf32> -> vector<72x128xf32>
    %c0_5 = arith.constant 0 : index
    %c2 = arith.constant 2 : index
    %c0_6 = arith.constant 0 : index
    %5 = vector.load %arg2[%c0_5, %c2, %c0_6] : memref<1x120x128xbf16, #tpu.memory_space<vmem>>, vector<1x72x128xbf16>
    %6 = vector.shape_cast %5 : vector<1x72x128xbf16> to vector<72x128xbf16>
    %c1 = arith.constant 1 : index
    %c0_7 = arith.constant 0 : index
    %c0_8 = arith.constant 0 : index
    %7 = vector.load %arg3[%c1, %c0_7, %c0_8] : memref<9x128x128xbf16, #tpu.memory_space<vmem>>, vector<1x128x128xbf16>
    %8 = vector.shape_cast %7 : vector<1x128x128xbf16> to vector<128x128xbf16>
    %cst_9 = arith.constant dense<0.000000e+00> : vector<72x128xf32>
    %9 = tpu.matmul %6, %8, %cst_9 {dimension_numbers = #tpu.dot_dimension_numbers<[1], [0], [0], [1], [0, 0, 1, 1], [], []>} : vector<72x128xbf16>, vector<128x128xbf16>, vector<72x128xf32> -> vector<72x128xf32>
    %10 = arith.addf %4, %9 : vector<72x128xf32>
    %c0_10 = arith.constant 0 : index
    %c4 = arith.constant 4 : index
    %c0_11 = arith.constant 0 : index
    %11 = vector.load %arg2[%c0_10, %c4, %c0_11] : memref<1x120x128xbf16, #tpu.memory_space<vmem>>, vector<1x72x128xbf16>
    %12 = vector.shape_cast %11 : vector<1x72x128xbf16> to vector<72x128xbf16>
    %c2_12 = arith.constant 2 : index
    %c0_13 = arith.constant 0 : index
    %c0_14 = arith.constant 0 : index
    %13 = vector.load %arg3[%c2_12, %c0_13, %c0_14] : memref<9x128x128xbf16, #tpu.memory_space<vmem>>, vector<1x128x128xbf16>
    %14 = vector.shape_cast %13 : vector<1x128x128xbf16> to vector<128x128xbf16>
    %cst_15 = arith.constant dense<0.000000e+00> : vector<72x128xf32>
    %15 = tpu.matmul %12, %14, %cst_15 {dimension_numbers = #tpu.dot_dimension_numbers<[1], [0], [0], [1], [0, 0, 1, 1], [], []>} : vector<72x128xbf16>, vector<128x128xbf16>, vector<72x128xf32> -> vector<72x128xf32>
    %16 = arith.addf %10, %15 : vector<72x128xf32>
    %c0_16 = arith.constant 0 : index
    %c22 = arith.constant 22 : index
    %c0_17 = arith.constant 0 : index
    %17 = vector.load %arg2[%c0_16, %c22, %c0_17] : memref<1x120x128xbf16, #tpu.memory_space<vmem>>, vector<1x72x128xbf16>
    %18 = vector.shape_cast %17 : vector<1x72x128xbf16> to vector<72x128xbf16>
    %c3 = arith.constant 3 : index
    %c0_18 = arith.constant 0 : index
    %c0_19 = arith.constant 0 : index
    %19 = vector.load %arg3[%c3, %c0_18, %c0_19] : memref<9x128x128xbf16, #tpu.memory_space<vmem>>, vector<1x128x128xbf16>
    %20 = vector.shape_cast %19 : vector<1x128x128xbf16> to vector<128x128xbf16>
    %cst_20 = arith.constant dense<0.000000e+00> : vector<72x128xf32>
    %21 = tpu.matmul %18, %20, %cst_20 {dimension_numbers = #tpu.dot_dimension_numbers<[1], [0], [0], [1], [0, 0, 1, 1], [], []>} : vector<72x128xbf16>, vector<128x128xbf16>, vector<72x128xf32> -> vector<72x128xf32>
    %22 = arith.addf %16, %21 : vector<72x128xf32>
    %c0_21 = arith.constant 0 : index
    %c24 = arith.constant 24 : index
    %c0_22 = arith.constant 0 : index
    %23 = vector.load %arg2[%c0_21, %c24, %c0_22] : memref<1x120x128xbf16, #tpu.memory_space<vmem>>, vector<1x72x128xbf16>
    %24 = vector.shape_cast %23 : vector<1x72x128xbf16> to vector<72x128xbf16>
    %c4_23 = arith.constant 4 : index
    %c0_24 = arith.constant 0 : index
    %c0_25 = arith.constant 0 : index
    %25 = vector.load %arg3[%c4_23, %c0_24, %c0_25] : memref<9x128x128xbf16, #tpu.memory_space<vmem>>, vector<1x128x128xbf16>
    %26 = vector.shape_cast %25 : vector<1x128x128xbf16> to vector<128x128xbf16>
    %cst_26 = arith.constant dense<0.000000e+00> : vector<72x128xf32>
    %27 = tpu.matmul %24, %26, %cst_26 {dimension_numbers = #tpu.dot_dimension_numbers<[1], [0], [0], [1], [0, 0, 1, 1], [], []>} : vector<72x128xbf16>, vector<128x128xbf16>, vector<72x128xf32> -> vector<72x128xf32>
    %28 = arith.addf %22, %27 : vector<72x128xf32>
    %c0_27 = arith.constant 0 : index
    %c26 = arith.constant 26 : index
    %c0_28 = arith.constant 0 : index
    %29 = vector.load %arg2[%c0_27, %c26, %c0_28] : memref<1x120x128xbf16, #tpu.memory_space<vmem>>, vector<1x72x128xbf16>
    %30 = vector.shape_cast %29 : vector<1x72x128xbf16> to vector<72x128xbf16>
    %c5 = arith.constant 5 : index
    %c0_29 = arith.constant 0 : index
    %c0_30 = arith.constant 0 : index
    %31 = vector.load %arg3[%c5, %c0_29, %c0_30] : memref<9x128x128xbf16, #tpu.memory_space<vmem>>, vector<1x128x128xbf16>
    %32 = vector.shape_cast %31 : vector<1x128x128xbf16> to vector<128x128xbf16>
    %cst_31 = arith.constant dense<0.000000e+00> : vector<72x128xf32>
    %33 = tpu.matmul %30, %32, %cst_31 {dimension_numbers = #tpu.dot_dimension_numbers<[1], [0], [0], [1], [0, 0, 1, 1], [], []>} : vector<72x128xbf16>, vector<128x128xbf16>, vector<72x128xf32> -> vector<72x128xf32>
    %34 = arith.addf %28, %33 : vector<72x128xf32>
    %c0_32 = arith.constant 0 : index
    %c44 = arith.constant 44 : index
    %c0_33 = arith.constant 0 : index
    %35 = vector.load %arg2[%c0_32, %c44, %c0_33] : memref<1x120x128xbf16, #tpu.memory_space<vmem>>, vector<1x72x128xbf16>
    %36 = vector.shape_cast %35 : vector<1x72x128xbf16> to vector<72x128xbf16>
    %c6 = arith.constant 6 : index
    %c0_34 = arith.constant 0 : index
    %c0_35 = arith.constant 0 : index
    %37 = vector.load %arg3[%c6, %c0_34, %c0_35] : memref<9x128x128xbf16, #tpu.memory_space<vmem>>, vector<1x128x128xbf16>
    %38 = vector.shape_cast %37 : vector<1x128x128xbf16> to vector<128x128xbf16>
    %cst_36 = arith.constant dense<0.000000e+00> : vector<72x128xf32>
    %39 = tpu.matmul %36, %38, %cst_36 {dimension_numbers = #tpu.dot_dimension_numbers<[1], [0], [0], [1], [0, 0, 1, 1], [], []>} : vector<72x128xbf16>, vector<128x128xbf16>, vector<72x128xf32> -> vector<72x128xf32>
    %40 = arith.addf %34, %39 : vector<72x128xf32>
    %c0_37 = arith.constant 0 : index
    %c46 = arith.constant 46 : index
    %c0_38 = arith.constant 0 : index
    %41 = vector.load %arg2[%c0_37, %c46, %c0_38] : memref<1x120x128xbf16, #tpu.memory_space<vmem>>, vector<1x72x128xbf16>
    %42 = vector.shape_cast %41 : vector<1x72x128xbf16> to vector<72x128xbf16>
    %c7 = arith.constant 7 : index
    %c0_39 = arith.constant 0 : index
    %c0_40 = arith.constant 0 : index
    %43 = vector.load %arg3[%c7, %c0_39, %c0_40] : memref<9x128x128xbf16, #tpu.memory_space<vmem>>, vector<1x128x128xbf16>
    %44 = vector.shape_cast %43 : vector<1x128x128xbf16> to vector<128x128xbf16>
    %cst_41 = arith.constant dense<0.000000e+00> : vector<72x128xf32>
    %45 = tpu.matmul %42, %44, %cst_41 {dimension_numbers = #tpu.dot_dimension_numbers<[1], [0], [0], [1], [0, 0, 1, 1], [], []>} : vector<72x128xbf16>, vector<128x128xbf16>, vector<72x128xf32> -> vector<72x128xf32>
    %46 = arith.addf %40, %45 : vector<72x128xf32>
    %c0_42 = arith.constant 0 : index
    %c48 = arith.constant 48 : index
    %c0_43 = arith.constant 0 : index
    %47 = vector.load %arg2[%c0_42, %c48, %c0_43] : memref<1x120x128xbf16, #tpu.memory_space<vmem>>, vector<1x72x128xbf16>
    %48 = vector.shape_cast %47 : vector<1x72x128xbf16> to vector<72x128xbf16>
    %c8 = arith.constant 8 : index
    %c0_44 = arith.constant 0 : index
    %c0_45 = arith.constant 0 : index
    %49 = vector.load %arg3[%c8, %c0_44, %c0_45] : memref<9x128x128xbf16, #tpu.memory_space<vmem>>, vector<1x128x128xbf16>
    %50 = vector.shape_cast %49 : vector<1x128x128xbf16> to vector<128x128xbf16>
    %cst_46 = arith.constant dense<0.000000e+00> : vector<72x128xf32>
    %51 = tpu.matmul %48, %50, %cst_46 {dimension_numbers = #tpu.dot_dimension_numbers<[1], [0], [0], [1], [0, 0, 1, 1], [], []>} : vector<72x128xbf16>, vector<128x128xbf16>, vector<72x128xf32> -> vector<72x128xf32>
    %52 = arith.addf %46, %51 : vector<72x128xf32>
    %c0_47 = arith.constant 0 : index
    %c0_48 = arith.constant 0 : index
    %53 = vector.load %arg4[%c0_47, %c0_48] : memref<8x128xf32, #tpu.memory_space<vmem>>, vector<8x128xf32>
    %54 = vector.extract_strided_slice %53 {offsets = [0, 0], sizes = [1, 128], strides = [1, 1]} : vector<8x128xf32> to vector<1x128xf32>
    %55 = vector.broadcast %54 : vector<1x128xf32> to vector<72x128xf32>
    %56 = arith.addf %52, %55 : vector<72x128xf32>
    %cst_49 = arith.constant 0.000000e+00 : f32
    %57 = vector.broadcast %cst_49 : f32 to vector<72x128xf32>
    %58 = arith.cmpf ogt, %56, %57 : vector<72x128xf32>
    %cst_50 = arith.constant 0.00999999977 : f32
    %59 = vector.broadcast %cst_50 : f32 to vector<72x128xf32>
    %60 = arith.mulf %59, %56 : vector<72x128xf32>
    %61 = arith.select %58, %56, %60 : vector<72x128xi1>, vector<72x128xf32>
    %62 = vector.extract_strided_slice %53 {offsets = [1, 0], sizes = [1, 128], strides = [1, 1]} : vector<8x128xf32> to vector<1x128xf32>
    %63 = vector.broadcast %62 : vector<1x128xf32> to vector<72x128xf32>
    %64 = arith.mulf %61, %63 : vector<72x128xf32>
    %65 = vector.extract_strided_slice %53 {offsets = [2, 0], sizes = [1, 128], strides = [1, 1]} : vector<8x128xf32> to vector<1x128xf32>
    %66 = vector.broadcast %65 : vector<1x128xf32> to vector<72x128xf32>
    %67 = arith.addf %64, %66 : vector<72x128xf32>
    %c0_51 = arith.constant 0 : index
    %c0_52 = arith.constant 0 : index
    %c0_53 = arith.constant 0 : index
    %68 = vector.load %arg5[%c0_51, %c0_52, %c0_53] : memref<1x72x128xbf16, #tpu.memory_space<vmem>>, vector<1x72x128xbf16>
    %69 = vector.shape_cast %68 : vector<1x72x128xbf16> to vector<72x128xbf16>
    %70 = arith.extf %69 : vector<72x128xbf16> to vector<72x128xf32>
    %71 = arith.addf %67, %70 : vector<72x128xf32>
    %72 = arith.truncf %71 : vector<72x128xf32> to vector<72x128xbf16>
    %c0_54 = arith.constant 0 : index
    %c0_55 = arith.constant 0 : index
    %c0_56 = arith.constant 0 : index
    %73 = vector.load %arg6[%c0_54, %c0_55, %c0_56] : memref<1x72x128xbf16, #tpu.memory_space<vmem>>, vector<1x72x128xbf16>
    %74 = vector.shape_cast %73 : vector<1x72x128xbf16> to vector<72x128xbf16>
    %75 = vector.shape_cast %72 : vector<72x128xbf16> to vector<1x72x128xbf16>
    tpu.vector_store %arg6[%c0_54, %c0_55, %c0_56], %75 {strides = array<i32>} : memref<1x72x128xbf16, #tpu.memory_space<vmem>>, vector<1x72x128xbf16>,
    return
  }
  func.func @transform_0(%arg0: i32, %arg1: i32) -> (i32, i32, i32) {
    %c0_i32 = arith.constant 0 : i32
    %c0_i32_0 = arith.constant 0 : i32
    %c0_i32_1 = arith.constant 0 : i32
    return %arg0, %c0_i32, %c0_i32_0 : i32, i32, i32
  }
  func.func @transform_1(%arg0: i32, %arg1: i32) -> (i32, i32, i32) {
    %c0_i32 = arith.constant 0 : i32
    %c0_i32_0 = arith.constant 0 : i32
    %c0_i32_1 = arith.constant 0 : i32
    return %c0_i32, %c0_i32_0, %arg1 : i32, i32, i32
  }
  func.func @transform_2(%arg0: i32, %arg1: i32) -> (i32, i32) {
    %c0_i32 = arith.constant 0 : i32
    %c0_i32_0 = arith.constant 0 : i32
    return %c0_i32, %arg1 : i32, i32
  }
  func.func @transform_3(%arg0: i32, %arg1: i32) -> (i32, i32, i32) {
    %c0_i32 = arith.constant 0 : i32
    %c0_i32_0 = arith.constant 0 : i32
    return %arg0, %c0_i32, %arg1 : i32, i32, i32
  }
  func.func @transform_4(%arg0: i32, %arg1: i32) -> (i32, i32, i32) {
    %c0_i32 = arith.constant 0 : i32
    %c0_i32_0 = arith.constant 0 : i32
    return %arg0, %c0_i32, %arg1 : i32, i32, i32
  }
}

</mosaic_0001>

<llo_original>
// kernel: tpu_custom_call.1
$region0: #{tpu_custom_call.1}
  #allocation0 [shape = 'u32[]', space=smem, size = 0x4, offset = 0x4, fixed_abs, tag = 'smem constant byte address 0x4 - core index']
  #allocation1 [shape = 'u32[144,128]{1,0:T(1,128)}', space=vmem, size = 0x12000, scoped, tag = 'internal scratch']
  %s0 = inlined_call_operand.hbm [shape: bf16[1,120,128], index: 0, kind: input, shape index: {}]
  %s1 = inlined_call_operand.hbm [shape: bf16[9,128,128], index: 1, kind: input, shape index: {}]
  %s2 = inlined_call_operand.hbm [shape: f32[8,128], index: 2, kind: input, shape index: {}]
  %s3 = inlined_call_operand.hbm [shape: bf16[1,72,128], index: 3, kind: input, shape index: {}]
  %s4 = inlined_call_operand.hbm [shape: bf16[1,72,128], index: 4, kind: output, shape index: {}]
  %s5 = sld [smem:[#allocation0]]
  $region42: #{tpu_custom_call.1} parent=0
    _
  %s7 = ssub.s32 1, %s5
  %s8 = scalar_select 0, %s7, %s5
  $region1: #{tpu_custom_call.1} parent=0
    #allocation2 [shape = 'u8[30720]{0}', space=vmem, size = 0x7800, scoped, tag = 'input window, operand 0, single buffered']
    #allocation3 [shape = 's32[1]{0}', space=sflag, size = 0x4, scoped, tag = 'scoped memory for tpu_custom_call.1']
    #allocation4 [shape = 's32[1]{0}', space=sflag, size = 0x4, scoped, tag = 'scoped memory for tpu_custom_call.1']
    #allocation5 [shape = 'u8[294912]{0}', space=vmem, size = 0x48000, scoped, tag = 'input window, operand 1, single buffered']
    #allocation6 [shape = 's32[1]{0}', space=sflag, size = 0x4, scoped, tag = 'scoped memory for tpu_custom_call.1']
    #allocation7 [shape = 'u8[4096]{0}', space=vmem, size = 0x1000, scoped, tag = 'input window, operand 2, single buffered']
    #allocation8 [shape = 'u8[18432]{0}', space=vmem, size = 0x4800, scoped, tag = 'input window, operand 3, single buffered']
    #allocation9 [shape = 's32[1]{0}', space=sflag, size = 0x4, scoped, tag = 'scoped memory for tpu_custom_call.1']
    #allocation10 [shape = 'u8[18432]{0}', space=vmem, size = 0x4800, scoped, tag = 'output window, operand 0, single buffered']
    %9 = vsyncpa [#allocation3], 0
    %10 = vsyncpa [#allocation6], 0
    %11 = vsyncpa [#allocation9], 0
    %12 = vsyncpa [#allocation4], 0
    // Predicated region
    $region2: #{tpu_custom_call.1} parent=1 // pred_check
      _
    $region3: #{tpu_custom_call.1} parent=1 // pred_check_branch
      %14 = sbr.rel (0) target = $region5
    $region4: #{tpu_custom_call.1} parent=1 // pred_region
      %s16 = ssub.s32 960, 960
      %17 = vsyncadd [#allocation3], %s16
      %s18 = sshll.u32 [#allocation2], 4
      %s19 = int_to_ptr.vmem [resolvable:$true] %s18
      %24 = dma.hbm_to_vmem [thread:$0]  %s0, 960, %s19, [#allocation3], 64, 64, 4
    $region5: #{tpu_custom_call.1} parent=1 // pred_fallthru
      _
    // Predicated region
    $region6: #{tpu_custom_call.1} parent=1 // pred_check
      _
    $region7: #{tpu_custom_call.1} parent=1 // pred_check_branch
      %26 = sbr.rel (0) target = $region9
    $region8: #{tpu_custom_call.1} parent=1 // pred_region
      %s28 = ssub.s32 9216, 9216
      %29 = vsyncadd [#allocation6], %s28
      %s30 = sshll.u32 [#allocation5], 4
      %s31 = int_to_ptr.vmem [resolvable:$true] %s30
      %36 = dma.hbm_to_vmem [thread:$0]  %s1, 9216, %s31, [#allocation6], 64, 64, 4
    $region9: #{tpu_custom_call.1} parent=1 // pred_fallthru
      _
    // Predicated region
    $region10: #{tpu_custom_call.1} parent=1 // pred_check
      _
    $region11: #{tpu_custom_call.1} parent=1 // pred_check_branch
      %38 = sbr.rel (0) target = $region13
    $region12: #{tpu_custom_call.1} parent=1 // pred_region
      %s40 = ssub.s32 128, 128
      %41 = vsyncadd [#allocation6], %s40
      %s43 = sshll.u32 [#allocation7], 4
      %s44 = int_to_ptr.vmem [resolvable:$true] %s43
      %46 = dma.hbm_to_vmem [thread:$0]  %s2, 128, %s44, [#allocation6]
    $region13: #{tpu_custom_call.1} parent=1 // pred_fallthru
      _
    // Predicated region
    $region14: #{tpu_custom_call.1} parent=1 // pred_check
      _
    $region15: #{tpu_custom_call.1} parent=1 // pred_check_branch
      %48 = sbr.rel (0) target = $region17
    $region16: #{tpu_custom_call.1} parent=1 // pred_region
      %s50 = ssub.s32 576, 576
      %51 = vsyncadd [#allocation9], %s50
      %s52 = sshll.u32 [#allocation8], 4
      %s53 = int_to_ptr.vmem [resolvable:$true] %s52
      %58 = dma.hbm_to_vmem [thread:$0]  %s3, 576, %s53, [#allocation9], 64, 64, 4
    $region17: #{tpu_custom_call.1} parent=1 // pred_fallthru
      _
    // Predicated region
    $region18: #{tpu_custom_call.1} parent=1 // pred_check
      _
    $region19: #{tpu_custom_call.1} parent=1 // pred_check_branch
      %60 = sbr.rel (0) target = $region21
    $region20: #{tpu_custom_call.1} parent=1 // pred_region
      %61 = dma.done [#allocation3], 960
    $region21: #{tpu_custom_call.1} parent=1 // pred_fallthru
      _
    // Predicated region
    $region22: #{tpu_custom_call.1} parent=1 // pred_check
      _
    $region23: #{tpu_custom_call.1} parent=1 // pred_check_branch
      %63 = sbr.rel (0) target = $region25
    $region24: #{tpu_custom_call.1} parent=1 // pred_region
      %64 = dma.done [#allocation6], 9216
    $region25: #{tpu_custom_call.1} parent=1 // pred_fallthru
      _
    // Predicated region
    $region26: #{tpu_custom_call.1} parent=1 // pred_check
      _
    $region27: #{tpu_custom_call.1} parent=1 // pred_check_branch
      %66 = sbr.rel (0) target = $region29
    $region28: #{tpu_custom_call.1} parent=1 // pred_region
      %67 = dma.done [#allocation6], 128
    $region29: #{tpu_custom_call.1} parent=1 // pred_fallthru
      _
    // Predicated region
    $region30: #{tpu_custom_call.1} parent=1 // pred_check
      _
    $region31: #{tpu_custom_call.1} parent=1 // pred_check_branch
      %69 = sbr.rel (0) target = $region33
    $region32: #{tpu_custom_call.1} parent=1 // pred_region
      %70 = dma.done [#allocation9], 576
    $region33: #{tpu_custom_call.1} parent=1 // pred_fallthru
      _
    %v72 = vld [vmem:[#allocation2] sm:$0xf]
    %v73 = vld [vmem:[#allocation2 + $0x4] sm:$0xf]
    %v74 = vld [vmem:[#allocation2 + $0x8] sm:$0xf]
    %v75 = vld [vmem:[#allocation2 + $0xc] sm:$0xf]
    %v76 = vld [vmem:[#allocation2 + $0x10] sm:$0xf]
    %v77 = vld [vmem:[#allocation2 + $0x14] sm:$0xf]
    %v78 = vld [vmem:[#allocation2 + $0x18] sm:$0xf]
    %v79 = vld [vmem:[#allocation2 + $0x1c] sm:$0xf]
    %v80 = vld [vmem:[#allocation2 + $0x20] sm:$0xf]
    %v81 = vld [vmem:[#allocation5] sm:$0xf]
    %v82 = vld [vmem:[#allocation5 + $0x4] sm:$0xf]
    %v83 = vld [vmem:[#allocation5 + $0x8] sm:$0xf]
    %v84 = vld [vmem:[#allocation5 + $0xc] sm:$0xf]
    %v85 = vld [vmem:[#allocation5 + $0x10] sm:$0xf]
    %v86 = vld [vmem:[#allocation5 + $0x14] sm:$0xf]
    %v87 = vld [vmem:[#allocation5 + $0x18] sm:$0xf]
    %v88 = vld [vmem:[#allocation5 + $0x1c] sm:$0xf]
    %v89 = vld [vmem:[#allocation5 + $0x20] sm:$0xf]
    %v90 = vld [vmem:[#allocation5 + $0x24] sm:$0xf]
    %v91 = vld [vmem:[#allocation5 + $0x28] sm:$0xf]
    %v92 = vld [vmem:[#allocation5 + $0x2c] sm:$0xf]
    %v93 = vld [vmem:[#allocation5 + $0x30] sm:$0xf]
    %v94 = vld [vmem:[#allocation5 + $0x34] sm:$0xf]
    %v95 = vld [vmem:[#allocation5 + $0x38] sm:$0xf]
    %v96 = vld [vmem:[#allocation5 + $0x3c] sm:$0xf]
    %v97 = vld [vmem:[#allocation2] sm:$0xe]
    %v98 = vld [vmem:[#allocation2 + $0x24] sm:$0x1]
    %s99 = scalar_lea.vmem [#allocation5], 64
    %v100 = vld [vmem:[%s99] sm:$0xf]
    %v101 = vld [vmem:[%s99 + $0x4] sm:$0xf]
    %v102 = vld [vmem:[%s99 + $0x8] sm:$0xf]
    %v103 = vld [vmem:[%s99 + $0xc] sm:$0xf]
    %v104 = vld [vmem:[%s99 + $0x10] sm:$0xf]
    %v105 = vld [vmem:[%s99 + $0x14] sm:$0xf]
    %v106 = vld [vmem:[%s99 + $0x18] sm:$0xf]
    %v107 = vld [vmem:[%s99 + $0x1c] sm:$0xf]
    %v108 = vld [vmem:[%s99 + $0x20] sm:$0xf]
    %v109 = vld [vmem:[%s99 + $0x24] sm:$0xf]
    %v110 = vld [vmem:[%s99 + $0x28] sm:$0xf]
    %v111 = vld [vmem:[%s99 + $0x2c] sm:$0xf]
    %v112 = vld [vmem:[%s99 + $0x30] sm:$0xf]
    %v113 = vld [vmem:[%s99 + $0x34] sm:$0xf]
    %v114 = vld [vmem:[%s99 + $0x38] sm:$0xf]
    %v115 = vld [vmem:[%s99 + $0x3c] sm:$0xf]
    %v126 = vunpack.c.l.b16 %v97
    %v127 = vunpack.c.l.b16 %v73
    %v128 = vunpack.c.l.b16 %v74
    %v129 = vunpack.c.l.b16 %v75
    %v130 = vunpack.c.l.b16 %v76
    %v131 = vunpack.c.l.b16 %v77
    %v132 = vunpack.c.l.b16 %v78
    %v133 = vunpack.c.l.b16 %v79
    %v134 = vunpack.c.l.b16 %v80
    %v135 = vunpack.c.l.b16 %v98
    %v136 = vpack.c.b16 %v127, %v126
    %v137 = vpack.c.b16 %v129, %v128
    %v138 = vpack.c.b16 %v131, %v130
    %v139 = vpack.c.b16 %v133, %v132
    %v140 = vpack.c.b16 %v135, %v134
    %vm141 = vcmask 1046528
    %v142 = vrot.slane %v136, 1
    %v143 = vrot.slane %v137, 1
    %v144 = vsel %vm141, %v142, %v143
    %v145 = vrot.slane %v138, 1
    %v146 = vsel %vm141, %v143, %v145
    %v147 = vrot.slane %v139, 1
    %v148 = vsel %vm141, %v145, %v147
    %v149 = vrot.slane %v140, 1
    %v150 = vsel %vm141, %v147, %v149
    %v172 = vunpack.c.l.b16 %v100
    %v173 = vunpack.c.l.b16 %v101
    %v174 = vunpack.c.l.b16 %v102
    %v175 = vunpack.c.l.b16 %v103
    %v176 = vunpack.c.l.b16 %v104
    %v177 = vunpack.c.l.b16 %v105
    %v178 = vunpack.c.l.b16 %v106
    %v179 = vunpack.c.l.b16 %v107
    %v180 = vunpack.c.l.b16 %v108
    %v181 = vunpack.c.l.b16 %v109
    %v182 = vunpack.c.l.b16 %v110
    %v183 = vunpack.c.l.b16 %v111
    %v184 = vunpack.c.l.b16 %v112
    %v185 = vunpack.c.l.b16 %v113
    %v186 = vunpack.c.l.b16 %v114
    %v187 = vunpack.c.l.b16 %v115
    %v188 = vpack.c.b16 %v173, %v172
    %v189 = vpack.c.b16 %v175, %v174
    %v190 = vpack.c.b16 %v177, %v176
    %v191 = vpack.c.b16 %v179, %v178
    %v192 = vpack.c.b16 %v181, %v180
    %v193 = vpack.c.b16 %v183, %v182
    %v194 = vpack.c.b16 %v185, %v184
    %v195 = vpack.c.b16 %v187, %v186
    %204 = vmatprep.subr.bf16.mxu0 0
    %205 = vmatpush1.bf16.msra.mxu0 %v195
    %206 = vmatprep.subr.bf16.mxu0 0
    %207 = vmatpush1.bf16.msra.mxu0 %v194
    %208 = vmatprep.subr.bf16.mxu0 0
    %209 = vmatpush1.bf16.msra.mxu0 %v193
    %210 = vmatprep.subr.bf16.mxu0 0
    %211 = vmatpush1.bf16.msra.mxu0 %v192
    %212 = vmatprep.subr.bf16.mxu0 0
    %213 = vmatpush1.bf16.msra.mxu0 %v191
    %214 = vmatprep.subr.bf16.mxu0 0
    %215 = vmatpush1.bf16.msra.mxu0 %v190
    %216 = vmatprep.subr.bf16.mxu0 0
    %217 = vmatpush1.bf16.msra.mxu0 %v189
    %218 = vmatprep.subr.bf16.mxu0 0
    %219 = vmatpush1.bf16.msra.mxu0 %v188
    %220 = vmatprep.subr.bf16.mxu0 0
    %221 = vmatpush2.bf16.msra.mxu0 0
    %222 = vmatprep.subr.bf16.mxu0 0
    %223 = vmatpush2.bf16.msra.mxu0 0
    %224 = vmatprep.subr.bf16.mxu0 0
    %225 = vmatpush2.bf16.msra.mxu0 0
    %226 = vmatprep.subr.bf16.mxu0 0
    %227 = vmatpush2.bf16.msra.mxu0 0
    %228 = vmatprep.subr.bf16.mxu0 0
    %229 = vmatpush2.bf16.msra.mxu0 0
    %230 = vmatprep.subr.bf16.mxu0 0
    %231 = vmatpush2.bf16.msra.mxu0 0
    %232 = vmatprep.subr.bf16.mxu0 0
    %233 = vmatpush2.bf16.msra.mxu0 0
    %234 = vmatprep.subr.bf16.mxu0 0
    %235 = vmatpush2.bf16.msra.mxu0 0
    %236 = vmatprep.mubr.bf16.mxu0 0
    %237 = vmatmul.mubr.bf16.gmra.mxu0 %v144
    %v238 = vpop.f32.mrf.mxu0
    %v239 = vadd.f32 0.0, %v238
    %v240 = vpop.f32.mrf.mxu0
    %v241 = vpop.f32.mrf.mxu0
    %v242 = vadd.f32 0.0, %v241
    %v243 = vpop.f32.mrf.mxu0
    %244 = vmatprep.mubr.bf16.mxu0 0
    %245 = vmatmul.mubr.bf16.gmra.mxu0 %v146
    %v246 = vpop.f32.mrf.mxu0
    %v247 = vadd.f32 0.0, %v246
    %v248 = vpop.f32.mrf.mxu0
    %v249 = vpop.f32.mrf.mxu0
    %v250 = vadd.f32 0.0, %v249
    %v251 = vpop.f32.mrf.mxu0
    %252 = vmatprep.mubr.bf16.mxu0 0
    %253 = vmatmul.mubr.bf16.gmra.mxu0 %v148
    %v254 = vpop.f32.mrf.mxu0
    %v255 = vadd.f32 0.0, %v254
    %v256 = vpop.f32.mrf.mxu0
    %v257 = vpop.f32.mrf.mxu0
    %v258 = vadd.f32 0.0, %v257
    %v259 = vpop.f32.mrf.mxu0
    %260 = vmatprep.mubr.bf16.mxu0 0
    %261 = vmatmul.mubr.bf16.gmra.mxu0 %v150
    %v262 = vpop.f32.mrf.mxu0
    %v263 = vadd.f32 0.0, %v262
    %v264 = vpop.f32.mrf.mxu0
    %v265 = vpop.f32.mrf.mxu0
    %v266 = vadd.f32 0.0, %v265
    %v267 = vpop.f32.mrf.mxu0
    %268 = vmatprep.mubr.bf16.mxu0 0
    %269 = vmatmul.mubr.bf16.gmra.mxu0 %v149
    %v270 = vpop.f32.mrf.mxu0
    %v271 = vadd.f32 0.0, %v270
    %v272 = vpop.f32.mrf.mxu0
    %v273 = vpop.f32.mrf.mxu0
    %v274 = vpop.f32.mrf.mxu0
    %275 = vdwg.mxu0
    %v277 = vunpack.c.l.b16 %v72
    %v278 = vpack.c.b16 %v127, %v277
    %v279 = vpack.c.b16 %v134, %v134
    %v301 = vunpack.c.l.b16 %v81
    %v302 = vunpack.c.l.b16 %v82
    %v303 = vunpack.c.l.b16 %v83
    %v304 = vunpack.c.l.b16 %v84
    %v305 = vunpack.c.l.b16 %v85
    %v306 = vunpack.c.l.b16 %v86
    %v307 = vunpack.c.l.b16 %v87
    %v308 = vunpack.c.l.b16 %v88
    %v309 = vunpack.c.l.b16 %v89
    %v310 = vunpack.c.l.b16 %v90
    %v311 = vunpack.c.l.b16 %v91
    %v312 = vunpack.c.l.b16 %v92
    %v313 = vunpack.c.l.b16 %v93
    %v314 = vunpack.c.l.b16 %v94
    %v315 = vunpack.c.l.b16 %v95
    %v316 = vunpack.c.l.b16 %v96
    %v317 = vpack.c.b16 %v302, %v301
    %v318 = vpack.c.b16 %v304, %v303
    %v319 = vpack.c.b16 %v306, %v305
    %v320 = vpack.c.b16 %v308, %v307
    %v321 = vpack.c.b16 %v310, %v309
    %v322 = vpack.c.b16 %v312, %v311
    %v323 = vpack.c.b16 %v314, %v313
    %v324 = vpack.c.b16 %v316, %v315
    %333 = vmatprep.subr.bf16.mxu0 0
    %334 = vmatpush1.bf16.msra.mxu0 %v324
    %335 = vmatprep.subr.bf16.mxu0 0
    %336 = vmatpush1.bf16.msra.mxu0 %v323
    %337 = vmatprep.subr.bf16.mxu0 0
    %338 = vmatpush1.bf16.msra.mxu0 %v322
    %339 = vmatprep.subr.bf16.mxu0 0
    %340 = vmatpush1.bf16.msra.mxu0 %v321
    %341 = vmatprep.subr.bf16.mxu0 0
    %342 = vmatpush1.bf16.msra.mxu0 %v320
    %343 = vmatprep.subr.bf16.mxu0 0
    %344 = vmatpush1.bf16.msra.mxu0 %v319
    %345 = vmatprep.subr.bf16.mxu0 0
    %346 = vmatpush1.bf16.msra.mxu0 %v318
    %347 = vmatprep.subr.bf16.mxu0 0
    %348 = vmatpush1.bf16.msra.mxu0 %v317
    %349 = vmatprep.subr.bf16.mxu0 0
    %350 = vmatpush2.bf16.msra.mxu0 0
    %351 = vmatprep.subr.bf16.mxu0 0
    %352 = vmatpush2.bf16.msra.mxu0 0
    %353 = vmatprep.subr.bf16.mxu0 0
    %354 = vmatpush2.bf16.msra.mxu0 0
    %355 = vmatprep.subr.bf16.mxu0 0
    %356 = vmatpush2.bf16.msra.mxu0 0
    %357 = vmatprep.subr.bf16.mxu0 0
    %358 = vmatpush2.bf16.msra.mxu0 0
    %359 = vmatprep.subr.bf16.mxu0 0
    %360 = vmatpush2.bf16.msra.mxu0 0
    %361 = vmatprep.subr.bf16.mxu0 0
    %362 = vmatpush2.bf16.msra.mxu0 0
    %363 = vmatprep.subr.bf16.mxu0 0
    %364 = vmatpush2.bf16.msra.mxu0 0
    %365 = vmatprep.mubr.bf16.mxu0 0
    %366 = vmatmul.mubr.bf16.gmra.mxu0 %v278
    %v367 = vpop.f32.mrf.mxu0
    %v368 = vadd.f32 %v239, %v367
    %v369 = vpop.f32.mrf.mxu0
    %v370 = vpop.f32.mrf.mxu0
    %v371 = vadd.f32 %v242, %v370
    %v372 = vpop.f32.mrf.mxu0
    %373 = vmatprep.mubr.bf16.mxu0 0
    %374 = vmatmul.mubr.bf16.gmra.mxu0 %v137
    %v375 = vpop.f32.mrf.mxu0
    %v376 = vadd.f32 %v247, %v375
    %v377 = vpop.f32.mrf.mxu0
    %v378 = vpop.f32.mrf.mxu0
    %v379 = vadd.f32 %v250, %v378
    %v380 = vpop.f32.mrf.mxu0
    %381 = vmatprep.mubr.bf16.mxu0 0
    %382 = vmatmul.mubr.bf16.gmra.mxu0 %v138
    %v383 = vpop.f32.mrf.mxu0
    %v384 = vadd.f32 %v255, %v383
    %v385 = vpop.f32.mrf.mxu0
    %v386 = vpop.f32.mrf.mxu0
    %v387 = vadd.f32 %v258, %v386
    %v388 = vpop.f32.mrf.mxu0
    %389 = vmatprep.mubr.bf16.mxu0 0
    %390 = vmatmul.mubr.bf16.gmra.mxu0 %v139
    %v391 = vpop.f32.mrf.mxu0
    %v392 = vadd.f32 %v263, %v391
    %v393 = vpop.f32.mrf.mxu0
    %v394 = vpop.f32.mrf.mxu0
    %v395 = vadd.f32 %v266, %v394
    %v396 = vpop.f32.mrf.mxu0
    %397 = vmatprep.mubr.bf16.mxu0 0
    %398 = vmatmul.mubr.bf16.gmra.mxu0 %v279
    %v399 = vpop.f32.mrf.mxu0
    %v400 = vadd.f32 %v271, %v399
    %v401 = vpop.f32.mrf.mxu0
    %v402 = vpop.f32.mrf.mxu0
    %v403 = vpop.f32.mrf.mxu0
    %404 = vdwg.mxu0
    %v405 = vld [vmem:[#allocation2] sm:$0xc]
    %v406 = vld [vmem:[#allocation2 + $0x24] sm:$0x3]
    %s407 = scalar_lea.vmem [#allocation5], 128
    %v408 = vld [vmem:[%s407] sm:$0xf]
    %v409 = vld [vmem:[%s407 + $0x4] sm:$0xf]
    %v410 = vld [vmem:[%s407 + $0x8] sm:$0xf]
    %v411 = vld [vmem:[%s407 + $0xc] sm:$0xf]
    %v412 = vld [vmem:[%s407 + $0x10] sm:$0xf]
    %v413 = vld [vmem:[%s407 + $0x14] sm:$0xf]
    %v414 = vld [vmem:[%s407 + $0x18] sm:$0xf]
    %v415 = vld [vmem:[%s407 + $0x1c] sm:$0xf]
    %v416 = vld [vmem:[%s407 + $0x20] sm:$0xf]
    %v417 = vld [vmem:[%s407 + $0x24] sm:$0xf]
    %v418 = vld [vmem:[%s407 + $0x28] sm:$0xf]
    %v419 = vld [vmem:[%s407 + $0x2c] sm:$0xf]
    %v420 = vld [vmem:[%s407 + $0x30] sm:$0xf]
    %v421 = vld [vmem:[%s407 + $0x34] sm:$0xf]
    %v422 = vld [vmem:[%s407 + $0x38] sm:$0xf]
    %v423 = vld [vmem:[%s407 + $0x3c] sm:$0xf]
    %v426 = vunpack.c.l.b16 %v405
    %v427 = vunpack.c.l.b16 %v406
    %v428 = vpack.c.b16 %v127, %v426
    %v429 = vpack.c.b16 %v427, %v134
    %vm430 = vcmask 1045504
    %v431 = vrot.slane %v428, 2
    %v432 = vrot.slane %v137, 2
    %v433 = vsel %vm430, %v431, %v432
    %v434 = vrot.slane %v138, 2
    %v435 = vsel %vm430, %v432, %v434
    %v436 = vrot.slane %v139, 2
    %v437 = vsel %vm430, %v434, %v436
    %v438 = vrot.slane %v429, 2
    %v439 = vsel %vm430, %v436, %v438
    %v461 = vunpack.c.l.b16 %v408
    %v462 = vunpack.c.l.b16 %v409
    %v463 = vunpack.c.l.b16 %v410
    %v464 = vunpack.c.l.b16 %v411
    %v465 = vunpack.c.l.b16 %v412
    %v466 = vunpack.c.l.b16 %v413
    %v467 = vunpack.c.l.b16 %v414
    %v468 = vunpack.c.l.b16 %v415
    %v469 = vunpack.c.l.b16 %v416
    %v470 = vunpack.c.l.b16 %v417
    %v471 = vunpack.c.l.b16 %v418
    %v472 = vunpack.c.l.b16 %v419
    %v473 = vunpack.c.l.b16 %v420
    %v474 = vunpack.c.l.b16 %v421
    %v475 = vunpack.c.l.b16 %v422
    %v476 = vunpack.c.l.b16 %v423
    %v477 = vpack.c.b16 %v462, %v461
    %v478 = vpack.c.b16 %v464, %v463
    %v479 = vpack.c.b16 %v466, %v465
    %v480 = vpack.c.b16 %v468, %v467
    %v481 = vpack.c.b16 %v470, %v469
    %v482 = vpack.c.b16 %v472, %v471
    %v483 = vpack.c.b16 %v474, %v473
    %v484 = vpack.c.b16 %v476, %v475
    %493 = vmatprep.subr.bf16.mxu0 0
    %494 = vmatpush1.bf16.msra.mxu0 %v484
    %495 = vmatprep.subr.bf16.mxu0 0
    %496 = vmatpush1.bf16.msra.mxu0 %v483
    %497 = vmatprep.subr.bf16.mxu0 0
    %498 = vmatpush1.bf16.msra.mxu0 %v482
    %499 = vmatprep.subr.bf16.mxu0 0
    %500 = vmatpush1.bf16.msra.mxu0 %v481
    %501 = vmatprep.subr.bf16.mxu0 0
    %502 = vmatpush1.bf16.msra.mxu0 %v480
    %503 = vmatprep.subr.bf16.mxu0 0
    %504 = vmatpush1.bf16.msra.mxu0 %v479
    %505 = vmatprep.subr.bf16.mxu0 0
    %506 = vmatpush1.bf16.msra.mxu0 %v478
    %507 = vmatprep.subr.bf16.mxu0 0
    %508 = vmatpush1.bf16.msra.mxu0 %v477
    %509 = vmatprep.subr.bf16.mxu0 0
    %510 = vmatpush2.bf16.msra.mxu0 0
    %511 = vmatprep.subr.bf16.mxu0 0
    %512 = vmatpush2.bf16.msra.mxu0 0
    %513 = vmatprep.subr.bf16.mxu0 0
    %514 = vmatpush2.bf16.msra.mxu0 0
    %515 = vmatprep.subr.bf16.mxu0 0
    %516 = vmatpush2.bf16.msra.mxu0 0
    %517 = vmatprep.subr.bf16.mxu0 0
    %518 = vmatpush2.bf16.msra.mxu0 0
    %519 = vmatprep.subr.bf16.mxu0 0
    %520 = vmatpush2.bf16.msra.mxu0 0
    %521 = vmatprep.subr.bf16.mxu0 0
    %522 = vmatpush2.bf16.msra.mxu0 0
    %523 = vmatprep.subr.bf16.mxu0 0
    %524 = vmatpush2.bf16.msra.mxu0 0
    %525 = vmatprep.mubr.bf16.mxu0 0
    %526 = vmatmul.mubr.bf16.gmra.mxu0 %v433
    %v527 = vpop.f32.mrf.mxu0
    %v528 = vadd.f32 0.0, %v527
    %v529 = vpop.f32.mrf.mxu0
    %v530 = vpop.f32.mrf.mxu0
    %v531 = vadd.f32 0.0, %v530
    %v532 = vpop.f32.mrf.mxu0
    %533 = vmatprep.mubr.bf16.mxu0 0
    %534 = vmatmul.mubr.bf16.gmra.mxu0 %v435
    %v535 = vpop.f32.mrf.mxu0
    %v536 = vadd.f32 0.0, %v535
    %v537 = vpop.f32.mrf.mxu0
    %v538 = vpop.f32.mrf.mxu0
    %v539 = vadd.f32 0.0, %v538
    %v540 = vpop.f32.mrf.mxu0
    %541 = vmatprep.mubr.bf16.mxu0 0
    %542 = vmatmul.mubr.bf16.gmra.mxu0 %v437
    %v543 = vpop.f32.mrf.mxu0
    %v544 = vadd.f32 0.0, %v543
    %v545 = vpop.f32.mrf.mxu0
    %v546 = vpop.f32.mrf.mxu0
    %v547 = vadd.f32 0.0, %v546
    %v548 = vpop.f32.mrf.mxu0
    %549 = vmatprep.mubr.bf16.mxu0 0
    %550 = vmatmul.mubr.bf16.gmra.mxu0 %v439
    %v551 = vpop.f32.mrf.mxu0
    %v552 = vadd.f32 0.0, %v551
    %v553 = vpop.f32.mrf.mxu0
    %v554 = vpop.f32.mrf.mxu0
    %v555 = vadd.f32 0.0, %v554
    %v556 = vpop.f32.mrf.mxu0
    %557 = vmatprep.mubr.bf16.mxu0 0
    %558 = vmatmul.mubr.bf16.gmra.mxu0 %v438
    %v559 = vpop.f32.mrf.mxu0
    %v560 = vadd.f32 0.0, %v559
    %v561 = vpop.f32.mrf.mxu0
    %v562 = vpop.f32.mrf.mxu0
    %v563 = vpop.f32.mrf.mxu0
    %564 = vdwg.mxu0
    %v565 = vadd.f32 %v368, %v528
    %v566 = vadd.f32 %v371, %v531
    %v567 = vadd.f32 %v376, %v536
    %v568 = vadd.f32 %v379, %v539
    %v569 = vadd.f32 %v384, %v544
    %v570 = vadd.f32 %v387, %v547
    %v571 = vadd.f32 %v392, %v552
    %v572 = vadd.f32 %v395, %v555
    %v573 = vadd.f32 %v400, %v560
    %v574 = vld [vmem:[#allocation2 + $0x8] sm:$0x8]
    %v575 = vld [vmem:[#allocation2 + $0xc] sm:$0xf]
    %v576 = vld [vmem:[#allocation2 + $0x10] sm:$0xf]
    %v577 = vld [vmem:[#allocation2 + $0x14] sm:$0xf]
    %v578 = vld [vmem:[#allocation2 + $0x18] sm:$0xf]
    %v579 = vld [vmem:[#allocation2 + $0x1c] sm:$0xf]
    %v580 = vld [vmem:[#allocation2 + $0x20] sm:$0xf]
    %v581 = vld [vmem:[#allocation2 + $0x24] sm:$0xf]
    %v582 = vld [vmem:[#allocation2 + $0x28] sm:$0xf]
    %v583 = vld [vmem:[#allocation2 + $0x2c] sm:$0x7]
    %s584 = scalar_lea.vmem [#allocation5], 192
    %v585 = vld [vmem:[%s584] sm:$0xf]
    %v586 = vld [vmem:[%s584 + $0x4] sm:$0xf]
    %v587 = vld [vmem:[%s584 + $0x8] sm:$0xf]
    %v588 = vld [vmem:[%s584 + $0xc] sm:$0xf]
    %v589 = vld [vmem:[%s584 + $0x10] sm:$0xf]
    %v590 = vld [vmem:[%s584 + $0x14] sm:$0xf]
    %v591 = vld [vmem:[%s584 + $0x18] sm:$0xf]
    %v592 = vld [vmem:[%s584 + $0x1c] sm:$0xf]
    %v593 = vld [vmem:[%s584 + $0x20] sm:$0xf]
    %v594 = vld [vmem:[%s584 + $0x24] sm:$0xf]
    %v595 = vld [vmem:[%s584 + $0x28] sm:$0xf]
    %v596 = vld [vmem:[%s584 + $0x2c] sm:$0xf]
    %v597 = vld [vmem:[%s584 + $0x30] sm:$0xf]
    %v598 = vld [vmem:[%s584 + $0x34] sm:$0xf]
    %v599 = vld [vmem:[%s584 + $0x38] sm:$0xf]
    %v600 = vld [vmem:[%s584 + $0x3c] sm:$0xf]
    %v611 = vunpack.c.l.b16 %v574
    %v612 = vunpack.c.l.b16 %v575
    %v613 = vunpack.c.l.b16 %v576
    %v614 = vunpack.c.l.b16 %v577
    %v615 = vunpack.c.l.b16 %v578
    %v616 = vunpack.c.l.b16 %v579
    %v617 = vunpack.c.l.b16 %v580
    %v618 = vunpack.c.l.b16 %v581
    %v619 = vunpack.c.l.b16 %v582
    %v620 = vunpack.c.l.b16 %v583
    %v621 = vpack.c.b16 %v612, %v611
    %v622 = vpack.c.b16 %v614, %v613
    %v623 = vpack.c.b16 %v616, %v615
    %v624 = vpack.c.b16 %v618, %v617
    %v625 = vpack.c.b16 %v620, %v619
    %vm626 = vcmask 1044480
    %v627 = vrot.slane %v621, 3
    %v628 = vrot.slane %v622, 3
    %v629 = vsel %vm626, %v627, %v628
    %v630 = vrot.slane %v623, 3
    %v631 = vsel %vm626, %v628, %v630
    %v632 = vrot.slane %v624, 3
    %v633 = vsel %vm626, %v630, %v632
    %v634 = vrot.slane %v625, 3
    %v635 = vsel %vm626, %v632, %v634
    %v657 = vunpack.c.l.b16 %v585
    %v658 = vunpack.c.l.b16 %v586
    %v659 = vunpack.c.l.b16 %v587
    %v660 = vunpack.c.l.b16 %v588
    %v661 = vunpack.c.l.b16 %v589
    %v662 = vunpack.c.l.b16 %v590
    %v663 = vunpack.c.l.b16 %v591
    %v664 = vunpack.c.l.b16 %v592
    %v665 = vunpack.c.l.b16 %v593
    %v666 = vunpack.c.l.b16 %v594
    %v667 = vunpack.c.l.b16 %v595
    %v668 = vunpack.c.l.b16 %v596
    %v669 = vunpack.c.l.b16 %v597
    %v670 = vunpack.c.l.b16 %v598
    %v671 = vunpack.c.l.b16 %v599
    %v672 = vunpack.c.l.b16 %v600
    %v673 = vpack.c.b16 %v658, %v657
    %v674 = vpack.c.b16 %v660, %v659
    %v675 = vpack.c.b16 %v662, %v661
    %v676 = vpack.c.b16 %v664, %v663
    %v677 = vpack.c.b16 %v666, %v665
    %v678 = vpack.c.b16 %v668, %v667
    %v679 = vpack.c.b16 %v670, %v669
    %v680 = vpack.c.b16 %v672, %v671
    %689 = vmatprep.subr.bf16.mxu0 0
    %690 = vmatpush1.bf16.msra.mxu0 %v680
    %691 = vmatprep.subr.bf16.mxu0 0
    %692 = vmatpush1.bf16.msra.mxu0 %v679
    %693 = vmatprep.subr.bf16.mxu0 0
    %694 = vmatpush1.bf16.msra.mxu0 %v678
    %695 = vmatprep.subr.bf16.mxu0 0
    %696 = vmatpush1.bf16.msra.mxu0 %v677
    %697 = vmatprep.subr.bf16.mxu0 0
    %698 = vmatpush1.bf16.msra.mxu0 %v676
    %699 = vmatprep.subr.bf16.mxu0 0
    %700 = vmatpush1.bf16.msra.mxu0 %v675
    %701 = vmatprep.subr.bf16.mxu0 0
    %702 = vmatpush1.bf16.msra.mxu0 %v674
    %703 = vmatprep.subr.bf16.mxu0 0
    %704 = vmatpush1.bf16.msra.mxu0 %v673
    %705 = vmatprep.subr.bf16.mxu0 0
    %706 = vmatpush2.bf16.msra.mxu0 0
    %707 = vmatprep.subr.bf16.mxu0 0
    %708 = vmatpush2.bf16.msra.mxu0 0
    %709 = vmatprep.subr.bf16.mxu0 0
    %710 = vmatpush2.bf16.msra.mxu0 0
    %711 = vmatprep.subr.bf16.mxu0 0
    %712 = vmatpush2.bf16.msra.mxu0 0
    %713 = vmatprep.subr.bf16.mxu0 0
    %714 = vmatpush2.bf16.msra.mxu0 0
    %715 = vmatprep.subr.bf16.mxu0 0
    %716 = vmatpush2.bf16.msra.mxu0 0
    %717 = vmatprep.subr.bf16.mxu0 0
    %718 = vmatpush2.bf16.msra.mxu0 0
    %719 = vmatprep.subr.bf16.mxu0 0
    %720 = vmatpush2.bf16.msra.mxu0 0
    %721 = vmatprep.mubr.bf16.mxu0 0
    %722 = vmatmul.mubr.bf16.gmra.mxu0 %v629
    %v723 = vpop.f32.mrf.mxu0
    %v724 = vadd.f32 0.0, %v723
    %v725 = vpop.f32.mrf.mxu0
    %v726 = vpop.f32.mrf.mxu0
    %v727 = vadd.f32 0.0, %v726
    %v728 = vpop.f32.mrf.mxu0
    %729 = vmatprep.mubr.bf16.mxu0 0
    %730 = vmatmul.mubr.bf16.gmra.mxu0 %v631
    %v731 = vpop.f32.mrf.mxu0
    %v732 = vadd.f32 0.0, %v731
    %v733 = vpop.f32.mrf.mxu0
    %v734 = vpop.f32.mrf.mxu0
    %v735 = vadd.f32 0.0, %v734
    %v736 = vpop.f32.mrf.mxu0
    %737 = vmatprep.mubr.bf16.mxu0 0
    %738 = vmatmul.mubr.bf16.gmra.mxu0 %v633
    %v739 = vpop.f32.mrf.mxu0
    %v740 = vadd.f32 0.0, %v739
    %v741 = vpop.f32.mrf.mxu0
    %v742 = vpop.f32.mrf.mxu0
    %v743 = vadd.f32 0.0, %v742
    %v744 = vpop.f32.mrf.mxu0
    %745 = vmatprep.mubr.bf16.mxu0 0
    %746 = vmatmul.mubr.bf16.gmra.mxu0 %v635
    %v747 = vpop.f32.mrf.mxu0
    %v748 = vadd.f32 0.0, %v747
    %v749 = vpop.f32.mrf.mxu0
    %v750 = vpop.f32.mrf.mxu0
    %v751 = vadd.f32 0.0, %v750
    %v752 = vpop.f32.mrf.mxu0
    %753 = vmatprep.mubr.bf16.mxu0 0
    %754 = vmatmul.mubr.bf16.gmra.mxu0 %v634
    %v755 = vpop.f32.mrf.mxu0
    %v756 = vadd.f32 0.0, %v755
    %v757 = vpop.f32.mrf.mxu0
    %v758 = vpop.f32.mrf.mxu0
    %v759 = vpop.f32.mrf.mxu0
    %760 = vdwg.mxu0
    %v761 = vadd.f32 %v565, %v724
    %v762 = vadd.f32 %v566, %v727
    %v763 = vadd.f32 %v567, %v732
    %v764 = vadd.f32 %v568, %v735
    %v765 = vadd.f32 %v569, %v740
    %v766 = vadd.f32 %v570, %v743
    %v767 = vadd.f32 %v571, %v748
    %v768 = vadd.f32 %v572, %v751
    %v769 = vadd.f32 %v573, %v756
    %v770 = vld [vmem:[#allocation2 + $0x2c] sm:$0xf]
    %s771 = scalar_lea.vmem [#allocation5], 256
    %v772 = vld [vmem:[%s771] sm:$0xf]
    %v773 = vld [vmem:[%s771 + $0x4] sm:$0xf]
    %v774 = vld [vmem:[%s771 + $0x8] sm:$0xf]
    %v775 = vld [vmem:[%s771 + $0xc] sm:$0xf]
    %v776 = vld [vmem:[%s771 + $0x10] sm:$0xf]
    %v777 = vld [vmem:[%s771 + $0x14] sm:$0xf]
    %v778 = vld [vmem:[%s771 + $0x18] sm:$0xf]
    %v779 = vld [vmem:[%s771 + $0x1c] sm:$0xf]
    %v780 = vld [vmem:[%s771 + $0x20] sm:$0xf]
    %v781 = vld [vmem:[%s771 + $0x24] sm:$0xf]
    %v782 = vld [vmem:[%s771 + $0x28] sm:$0xf]
    %v783 = vld [vmem:[%s771 + $0x2c] sm:$0xf]
    %v784 = vld [vmem:[%s771 + $0x30] sm:$0xf]
    %v785 = vld [vmem:[%s771 + $0x34] sm:$0xf]
    %v786 = vld [vmem:[%s771 + $0x38] sm:$0xf]
    %v787 = vld [vmem:[%s771 + $0x3c] sm:$0xf]
    %v789 = vunpack.c.l.b16 %v770
    %v790 = vpack.c.b16 %v613, %v612
    %v791 = vpack.c.b16 %v615, %v614
    %v792 = vpack.c.b16 %v617, %v616
    %v793 = vpack.c.b16 %v619, %v618
    %v794 = vpack.c.b16 %v789, %v789
    %v816 = vunpack.c.l.b16 %v772
    %v817 = vunpack.c.l.b16 %v773
    %v818 = vunpack.c.l.b16 %v774
    %v819 = vunpack.c.l.b16 %v775
    %v820 = vunpack.c.l.b16 %v776
    %v821 = vunpack.c.l.b16 %v777
    %v822 = vunpack.c.l.b16 %v778
    %v823 = vunpack.c.l.b16 %v779
    %v824 = vunpack.c.l.b16 %v780
    %v825 = vunpack.c.l.b16 %v781
    %v826 = vunpack.c.l.b16 %v782
    %v827 = vunpack.c.l.b16 %v783
    %v828 = vunpack.c.l.b16 %v784
    %v829 = vunpack.c.l.b16 %v785
    %v830 = vunpack.c.l.b16 %v786
    %v831 = vunpack.c.l.b16 %v787
    %v832 = vpack.c.b16 %v817, %v816
    %v833 = vpack.c.b16 %v819, %v818
    %v834 = vpack.c.b16 %v821, %v820
    %v835 = vpack.c.b16 %v823, %v822
    %v836 = vpack.c.b16 %v825, %v824
    %v837 = vpack.c.b16 %v827, %v826
    %v838 = vpack.c.b16 %v829, %v828
    %v839 = vpack.c.b16 %v831, %v830
    %848 = vmatprep.subr.bf16.mxu0 0
    %849 = vmatpush1.bf16.msra.mxu0 %v839
    %850 = vmatprep.subr.bf16.mxu0 0
    %851 = vmatpush1.bf16.msra.mxu0 %v838
    %852 = vmatprep.subr.bf16.mxu0 0
    %853 = vmatpush1.bf16.msra.mxu0 %v837
    %854 = vmatprep.subr.bf16.mxu0 0
    %855 = vmatpush1.bf16.msra.mxu0 %v836
    %856 = vmatprep.subr.bf16.mxu0 0
    %857 = vmatpush1.bf16.msra.mxu0 %v835
    %858 = vmatprep.subr.bf16.mxu0 0
    %859 = vmatpush1.bf16.msra.mxu0 %v834
    %860 = vmatprep.subr.bf16.mxu0 0
    %861 = vmatpush1.bf16.msra.mxu0 %v833
    %862 = vmatprep.subr.bf16.mxu0 0
    %863 = vmatpush1.bf16.msra.mxu0 %v832
    %864 = vmatprep.subr.bf16.mxu0 0
    %865 = vmatpush2.bf16.msra.mxu0 0
    %866 = vmatprep.subr.bf16.mxu0 0
    %867 = vmatpush2.bf16.msra.mxu0 0
    %868 = vmatprep.subr.bf16.mxu0 0
    %869 = vmatpush2.bf16.msra.mxu0 0
    %870 = vmatprep.subr.bf16.mxu0 0
    %871 = vmatpush2.bf16.msra.mxu0 0
    %872 = vmatprep.subr.bf16.mxu0 0
    %873 = vmatpush2.bf16.msra.mxu0 0
    %874 = vmatprep.subr.bf16.mxu0 0
    %875 = vmatpush2.bf16.msra.mxu0 0
    %876 = vmatprep.subr.bf16.mxu0 0
    %877 = vmatpush2.bf16.msra.mxu0 0
    %878 = vmatprep.subr.bf16.mxu0 0
    %879 = vmatpush2.bf16.msra.mxu0 0
    %880 = vmatprep.mubr.bf16.mxu0 0
    %881 = vmatmul.mubr.bf16.gmra.mxu0 %v790
    %v882 = vpop.f32.mrf.mxu0
    %v883 = vadd.f32 0.0, %v882
    %v884 = vpop.f32.mrf.mxu0
    %v885 = vpop.f32.mrf.mxu0
    %v886 = vadd.f32 0.0, %v885
    %v887 = vpop.f32.mrf.mxu0
    %888 = vmatprep.mubr.bf16.mxu0 0
    %889 = vmatmul.mubr.bf16.gmra.mxu0 %v791
    %v890 = vpop.f32.mrf.mxu0
    %v891 = vadd.f32 0.0, %v890
    %v892 = vpop.f32.mrf.mxu0
    %v893 = vpop.f32.mrf.mxu0
    %v894 = vadd.f32 0.0, %v893
    %v895 = vpop.f32.mrf.mxu0
    %896 = vmatprep.mubr.bf16.mxu0 0
    %897 = vmatmul.mubr.bf16.gmra.mxu0 %v792
    %v898 = vpop.f32.mrf.mxu0
    %v899 = vadd.f32 0.0, %v898
    %v900 = vpop.f32.mrf.mxu0
    %v901 = vpop.f32.mrf.mxu0
    %v902 = vadd.f32 0.0, %v901
    %v903 = vpop.f32.mrf.mxu0
    %904 = vmatprep.mubr.bf16.mxu0 0
    %905 = vmatmul.mubr.bf16.gmra.mxu0 %v793
    %v906 = vpop.f32.mrf.mxu0
    %v907 = vadd.f32 0.0, %v906
    %v908 = vpop.f32.mrf.mxu0
    %v909 = vpop.f32.mrf.mxu0
    %v910 = vadd.f32 0.0, %v909
    %v911 = vpop.f32.mrf.mxu0
    %912 = vmatprep.mubr.bf16.mxu0 0
    %913 = vmatmul.mubr.bf16.gmra.mxu0 %v794
    %v914 = vpop.f32.mrf.mxu0
    %v915 = vadd.f32 0.0, %v914
    %v916 = vpop.f32.mrf.mxu0
    %v917 = vpop.f32.mrf.mxu0
    %v918 = vpop.f32.mrf.mxu0
    %919 = vdwg.mxu0
    %v920 = vadd.f32 %v761, %v883
    %v921 = vadd.f32 %v762, %v886
    %v922 = vadd.f32 %v763, %v891
    %v923 = vadd.f32 %v764, %v894
    %v924 = vadd.f32 %v765, %v899
    %v925 = vadd.f32 %v766, %v902
    %v926 = vadd.f32 %v767, %v907
    %v927 = vadd.f32 %v768, %v910
    %v928 = vadd.f32 %v769, %v915
    %v929 = vld [vmem:[#allocation2 + $0xc] sm:$0xe]
    %v930 = vld [vmem:[#allocation2 + $0x10] sm:$0xf]
    %v931 = vld [vmem:[#allocation2 + $0x14] sm:$0xf]
    %v932 = vld [vmem:[#allocation2 + $0x18] sm:$0xf]
    %v933 = vld [vmem:[#allocation2 + $0x1c] sm:$0xf]
    %v934 = vld [vmem:[#allocation2 + $0x20] sm:$0xf]
    %v935 = vld [vmem:[#allocation2 + $0x24] sm:$0xf]
    %v936 = vld [vmem:[#allocation2 + $0x28] sm:$0xf]
    %v937 = vld [vmem:[#allocation2 + $0x2c] sm:$0xf]
    %v938 = vld [vmem:[#allocation2 + $0x30] sm:$0x1]
    %s939 = scalar_lea.vmem [#allocation5], 320
    %v940 = vld [vmem:[%s939] sm:$0xf]
    %v941 = vld [vmem:[%s939 + $0x4] sm:$0xf]
    %v942 = vld [vmem:[%s939 + $0x8] sm:$0xf]
    %v943 = vld [vmem:[%s939 + $0xc] sm:$0xf]
    %v944 = vld [vmem:[%s939 + $0x10] sm:$0xf]
    %v945 = vld [vmem:[%s939 + $0x14] sm:$0xf]
    %v946 = vld [vmem:[%s939 + $0x18] sm:$0xf]
    %v947 = vld [vmem:[%s939 + $0x1c] sm:$0xf]
    %v948 = vld [vmem:[%s939 + $0x20] sm:$0xf]
    %v949 = vld [vmem:[%s939 + $0x24] sm:$0xf]
    %v950 = vld [vmem:[%s939 + $0x28] sm:$0xf]
    %v951 = vld [vmem:[%s939 + $0x2c] sm:$0xf]
    %v952 = vld [vmem:[%s939 + $0x30] sm:$0xf]
    %v953 = vld [vmem:[%s939 + $0x34] sm:$0xf]
    %v954 = vld [vmem:[%s939 + $0x38] sm:$0xf]
    %v955 = vld [vmem:[%s939 + $0x3c] sm:$0xf]
    %v966 = vunpack.c.l.b16 %v929
    %v967 = vunpack.c.l.b16 %v930
    %v968 = vunpack.c.l.b16 %v931
    %v969 = vunpack.c.l.b16 %v932
    %v970 = vunpack.c.l.b16 %v933
    %v971 = vunpack.c.l.b16 %v934
    %v972 = vunpack.c.l.b16 %v935
    %v973 = vunpack.c.l.b16 %v936
    %v974 = vunpack.c.l.b16 %v937
    %v975 = vunpack.c.l.b16 %v938
    %v976 = vpack.c.b16 %v967, %v966
    %v977 = vpack.c.b16 %v969, %v968
    %v978 = vpack.c.b16 %v971, %v970
    %v979 = vpack.c.b16 %v973, %v972
    %v980 = vpack.c.b16 %v975, %v974
    %v981 = vrot.slane %v976, 1
    %v982 = vrot.slane %v977, 1
    %v983 = vsel %vm141, %v981, %v982
    %v984 = vrot.slane %v978, 1
    %v985 = vsel %vm141, %v982, %v984
    %v986 = vrot.slane %v979, 1
    %v987 = vsel %vm141, %v984, %v986
    %v988 = vrot.slane %v980, 1
    %v989 = vsel %vm141, %v986, %v988
    %v1011 = vunpack.c.l.b16 %v940
    %v1012 = vunpack.c.l.b16 %v941
    %v1013 = vunpack.c.l.b16 %v942
    %v1014 = vunpack.c.l.b16 %v943
    %v1015 = vunpack.c.l.b16 %v944
    %v1016 = vunpack.c.l.b16 %v945
    %v1017 = vunpack.c.l.b16 %v946
    %v1018 = vunpack.c.l.b16 %v947
    %v1019 = vunpack.c.l.b16 %v948
    %v1020 = vunpack.c.l.b16 %v949
    %v1021 = vunpack.c.l.b16 %v950
    %v1022 = vunpack.c.l.b16 %v951
    %v1023 = vunpack.c.l.b16 %v952
    %v1024 = vunpack.c.l.b16 %v953
    %v1025 = vunpack.c.l.b16 %v954
    %v1026 = vunpack.c.l.b16 %v955
    %v1027 = vpack.c.b16 %v1012, %v1011
    %v1028 = vpack.c.b16 %v1014, %v1013
    %v1029 = vpack.c.b16 %v1016, %v1015
    %v1030 = vpack.c.b16 %v1018, %v1017
    %v1031 = vpack.c.b16 %v1020, %v1019
    %v1032 = vpack.c.b16 %v1022, %v1021
    %v1033 = vpack.c.b16 %v1024, %v1023
    %v1034 = vpack.c.b16 %v1026, %v1025
    %1043 = vmatprep.subr.bf16.mxu0 0
    %1044 = vmatpush1.bf16.msra.mxu0 %v1034
    %1045 = vmatprep.subr.bf16.mxu0 0
    %1046 = vmatpush1.bf16.msra.mxu0 %v1033
    %1047 = vmatprep.subr.bf16.mxu0 0
    %1048 = vmatpush1.bf16.msra.mxu0 %v1032
    %1049 = vmatprep.subr.bf16.mxu0 0
    %1050 = vmatpush1.bf16.msra.mxu0 %v1031
    %1051 = vmatprep.subr.bf16.mxu0 0
    %1052 = vmatpush1.bf16.msra.mxu0 %v1030
    %1053 = vmatprep.subr.bf16.mxu0 0
    %1054 = vmatpush1.bf16.msra.mxu0 %v1029
    %1055 = vmatprep.subr.bf16.mxu0 0
    %1056 = vmatpush1.bf16.msra.mxu0 %v1028
    %1057 = vmatprep.subr.bf16.mxu0 0
    %1058 = vmatpush1.bf16.msra.mxu0 %v1027
    %1059 = vmatprep.subr.bf16.mxu0 0
    %1060 = vmatpush2.bf16.msra.mxu0 0
    %1061 = vmatprep.subr.bf16.mxu0 0
    %1062 = vmatpush2.bf16.msra.mxu0 0
    %1063 = vmatprep.subr.bf16.mxu0 0
    %1064 = vmatpush2.bf16.msra.mxu0 0
    %1065 = vmatprep.subr.bf16.mxu0 0
    %1066 = vmatpush2.bf16.msra.mxu0 0
    %1067 = vmatprep.subr.bf16.mxu0 0
    %1068 = vmatpush2.bf16.msra.mxu0 0
    %1069 = vmatprep.subr.bf16.mxu0 0
    %1070 = vmatpush2.bf16.msra.mxu0 0
    %1071 = vmatprep.subr.bf16.mxu0 0
    %1072 = vmatpush2.bf16.msra.mxu0 0
    %1073 = vmatprep.subr.bf16.mxu0 0
    %1074 = vmatpush2.bf16.msra.mxu0 0
    %1075 = vmatprep.mubr.bf16.mxu0 0
    %1076 = vmatmul.mubr.bf16.gmra.mxu0 %v983
    %v1077 = vpop.f32.mrf.mxu0
    %v1078 = vadd.f32 0.0, %v1077
    %v1079 = vpop.f32.mrf.mxu0
    %v1080 = vpop.f32.mrf.mxu0
    %v1081 = vadd.f32 0.0, %v1080
    %v1082 = vpop.f32.mrf.mxu0
    %1083 = vmatprep.mubr.bf16.mxu0 0
    %1084 = vmatmul.mubr.bf16.gmra.mxu0 %v985
    %v1085 = vpop.f32.mrf.mxu0
    %v1086 = vadd.f32 0.0, %v1085
    %v1087 = vpop.f32.mrf.mxu0
    %v1088 = vpop.f32.mrf.mxu0
    %v1089 = vadd.f32 0.0, %v1088
    %v1090 = vpop.f32.mrf.mxu0
    %1091 = vmatprep.mubr.bf16.mxu0 0
    %1092 = vmatmul.mubr.bf16.gmra.mxu0 %v987
    %v1093 = vpop.f32.mrf.mxu0
    %v1094 = vadd.f32 0.0, %v1093
    %v1095 = vpop.f32.mrf.mxu0
    %v1096 = vpop.f32.mrf.mxu0
    %v1097 = vadd.f32 0.0, %v1096
    %v1098 = vpop.f32.mrf.mxu0
    %1099 = vmatprep.mubr.bf16.mxu0 0
    %1100 = vmatmul.mubr.bf16.gmra.mxu0 %v989
    %v1101 = vpop.f32.mrf.mxu0
    %v1102 = vadd.f32 0.0, %v1101
    %v1103 = vpop.f32.mrf.mxu0
    %v1104 = vpop.f32.mrf.mxu0
    %v1105 = vadd.f32 0.0, %v1104
    %v1106 = vpop.f32.mrf.mxu0
    %1107 = vmatprep.mubr.bf16.mxu0 0
    %1108 = vmatmul.mubr.bf16.gmra.mxu0 %v988
    %v1109 = vpop.f32.mrf.mxu0
    %v1110 = vadd.f32 0.0, %v1109
    %v1111 = vpop.f32.mrf.mxu0
    %v1112 = vpop.f32.mrf.mxu0
    %v1113 = vpop.f32.mrf.mxu0
    %1114 = vdwg.mxu0
    %v1115 = vadd.f32 %v920, %v1078
    %v1116 = vadd.f32 %v921, %v1081
    %v1117 = vadd.f32 %v922, %v1086
    %v1118 = vadd.f32 %v923, %v1089
    %v1119 = vadd.f32 %v924, %v1094
    %v1120 = vadd.f32 %v925, %v1097
    %v1121 = vadd.f32 %v926, %v1102
    %v1122 = vadd.f32 %v927, %v1105
    %v1123 = vadd.f32 %v928, %v1110
    %v1124 = vld [vmem:[#allocation2 + $0x14] sm:$0xc]
    %v1125 = vld [vmem:[#allocation2 + $0x18] sm:$0xf]
    %v1126 = vld [vmem:[#allocation2 + $0x1c] sm:$0xf]
    %v1127 = vld [vmem:[#allocation2 + $0x20] sm:$0xf]
    %v1128 = vld [vmem:[#allocation2 + $0x24] sm:$0xf]
    %v1129 = vld [vmem:[#allocation2 + $0x28] sm:$0xf]
    %v1130 = vld [vmem:[#allocation2 + $0x2c] sm:$0xf]
    %v1131 = vld [vmem:[#allocation2 + $0x30] sm:$0xf]
    %v1132 = vld [vmem:[#allocation2 + $0x34] sm:$0xf]
    %v1133 = vld [vmem:[#allocation2 + $0x38] sm:$0x3]
    %s1134 = scalar_lea.vmem [#allocation5], 384
    %v1135 = vld [vmem:[%s1134] sm:$0xf]
    %v1136 = vld [vmem:[%s1134 + $0x4] sm:$0xf]
    %v1137 = vld [vmem:[%s1134 + $0x8] sm:$0xf]
    %v1138 = vld [vmem:[%s1134 + $0xc] sm:$0xf]
    %v1139 = vld [vmem:[%s1134 + $0x10] sm:$0xf]
    %v1140 = vld [vmem:[%s1134 + $0x14] sm:$0xf]
    %v1141 = vld [vmem:[%s1134 + $0x18] sm:$0xf]
    %v1142 = vld [vmem:[%s1134 + $0x1c] sm:$0xf]
    %v1143 = vld [vmem:[%s1134 + $0x20] sm:$0xf]
    %v1144 = vld [vmem:[%s1134 + $0x24] sm:$0xf]
    %v1145 = vld [vmem:[%s1134 + $0x28] sm:$0xf]
    %v1146 = vld [vmem:[%s1134 + $0x2c] sm:$0xf]
    %v1147 = vld [vmem:[%s1134 + $0x30] sm:$0xf]
    %v1148 = vld [vmem:[%s1134 + $0x34] sm:$0xf]
    %v1149 = vld [vmem:[%s1134 + $0x38] sm:$0xf]
    %v1150 = vld [vmem:[%s1134 + $0x3c] sm:$0xf]
    %v1161 = vunpack.c.l.b16 %v1124
    %v1162 = vunpack.c.l.b16 %v1125
    %v1163 = vunpack.c.l.b16 %v1126
    %v1164 = vunpack.c.l.b16 %v1127
    %v1165 = vunpack.c.l.b16 %v1128
    %v1166 = vunpack.c.l.b16 %v1129
    %v1167 = vunpack.c.l.b16 %v1130
    %v1168 = vunpack.c.l.b16 %v1131
    %v1169 = vunpack.c.l.b16 %v1132
    %v1170 = vunpack.c.l.b16 %v1133
    %v1171 = vpack.c.b16 %v1162, %v1161
    %v1172 = vpack.c.b16 %v1164, %v1163
    %v1173 = vpack.c.b16 %v1166, %v1165
    %v1174 = vpack.c.b16 %v1168, %v1167
    %v1175 = vpack.c.b16 %v1170, %v1169
    %v1176 = vrot.slane %v1171, 2
    %v1177 = vrot.slane %v1172, 2
    %v1178 = vsel %vm430, %v1176, %v1177
    %v1179 = vrot.slane %v1173, 2
    %v1180 = vsel %vm430, %v1177, %v1179
    %v1181 = vrot.slane %v1174, 2
    %v1182 = vsel %vm430, %v1179, %v1181
    %v1183 = vrot.slane %v1175, 2
    %v1184 = vsel %vm430, %v1181, %v1183
    %v1206 = vunpack.c.l.b16 %v1135
    %v1207 = vunpack.c.l.b16 %v1136
    %v1208 = vunpack.c.l.b16 %v1137
    %v1209 = vunpack.c.l.b16 %v1138
    %v1210 = vunpack.c.l.b16 %v1139
    %v1211 = vunpack.c.l.b16 %v1140
    %v1212 = vunpack.c.l.b16 %v1141
    %v1213 = vunpack.c.l.b16 %v1142
    %v1214 = vunpack.c.l.b16 %v1143
    %v1215 = vunpack.c.l.b16 %v1144
    %v1216 = vunpack.c.l.b16 %v1145
    %v1217 = vunpack.c.l.b16 %v1146
    %v1218 = vunpack.c.l.b16 %v1147
    %v1219 = vunpack.c.l.b16 %v1148
    %v1220 = vunpack.c.l.b16 %v1149
    %v1221 = vunpack.c.l.b16 %v1150
    %v1222 = vpack.c.b16 %v1207, %v1206
    %v1223 = vpack.c.b16 %v1209, %v1208
    %v1224 = vpack.c.b16 %v1211, %v1210
    %v1225 = vpack.c.b16 %v1213, %v1212
    %v1226 = vpack.c.b16 %v1215, %v1214
    %v1227 = vpack.c.b16 %v1217, %v1216
    %v1228 = vpack.c.b16 %v1219, %v1218
    %v1229 = vpack.c.b16 %v1221, %v1220
    %1238 = vmatprep.subr.bf16.mxu0 0
    %1239 = vmatpush1.bf16.msra.mxu0 %v1229
    %1240 = vmatprep.subr.bf16.mxu0 0
    %1241 = vmatpush1.bf16.msra.mxu0 %v1228
    %1242 = vmatprep.subr.bf16.mxu0 0
    %1243 = vmatpush1.bf16.msra.mxu0 %v1227
    %1244 = vmatprep.subr.bf16.mxu0 0
    %1245 = vmatpush1.bf16.msra.mxu0 %v1226
    %1246 = vmatprep.subr.bf16.mxu0 0
    %1247 = vmatpush1.bf16.msra.mxu0 %v1225
    %1248 = vmatprep.subr.bf16.mxu0 0
    %1249 = vmatpush1.bf16.msra.mxu0 %v1224
    %1250 = vmatprep.subr.bf16.mxu0 0
    %1251 = vmatpush1.bf16.msra.mxu0 %v1223
    %1252 = vmatprep.subr.bf16.mxu0 0
    %1253 = vmatpush1.bf16.msra.mxu0 %v1222
    %1254 = vmatprep.subr.bf16.mxu0 0
    %1255 = vmatpush2.bf16.msra.mxu0 0
    %1256 = vmatprep.subr.bf16.mxu0 0
    %1257 = vmatpush2.bf16.msra.mxu0 0
    %1258 = vmatprep.subr.bf16.mxu0 0
    %1259 = vmatpush2.bf16.msra.mxu0 0
    %1260 = vmatprep.subr.bf16.mxu0 0
    %1261 = vmatpush2.bf16.msra.mxu0 0
    %1262 = vmatprep.subr.bf16.mxu0 0
    %1263 = vmatpush2.bf16.msra.mxu0 0
    %1264 = vmatprep.subr.bf16.mxu0 0
    %1265 = vmatpush2.bf16.msra.mxu0 0
    %1266 = vmatprep.subr.bf16.mxu0 0
    %1267 = vmatpush2.bf16.msra.mxu0 0
    %1268 = vmatprep.subr.bf16.mxu0 0
    %1269 = vmatpush2.bf16.msra.mxu0 0
    %1270 = vmatprep.mubr.bf16.mxu0 0
    %1271 = vmatmul.mubr.bf16.gmra.mxu0 %v1178
    %v1272 = vpop.f32.mrf.mxu0
    %v1273 = vadd.f32 0.0, %v1272
    %v1274 = vpop.f32.mrf.mxu0
    %v1275 = vpop.f32.mrf.mxu0
    %v1276 = vadd.f32 0.0, %v1275
    %v1277 = vpop.f32.mrf.mxu0
    %1278 = vmatprep.mubr.bf16.mxu0 0
    %1279 = vmatmul.mubr.bf16.gmra.mxu0 %v1180
    %v1280 = vpop.f32.mrf.mxu0
    %v1281 = vadd.f32 0.0, %v1280
    %v1282 = vpop.f32.mrf.mxu0
    %v1283 = vpop.f32.mrf.mxu0
    %v1284 = vadd.f32 0.0, %v1283
    %v1285 = vpop.f32.mrf.mxu0
    %1286 = vmatprep.mubr.bf16.mxu0 0
    %1287 = vmatmul.mubr.bf16.gmra.mxu0 %v1182
    %v1288 = vpop.f32.mrf.mxu0
    %v1289 = vadd.f32 0.0, %v1288
    %v1290 = vpop.f32.mrf.mxu0
    %v1291 = vpop.f32.mrf.mxu0
    %v1292 = vadd.f32 0.0, %v1291
    %v1293 = vpop.f32.mrf.mxu0
    %1294 = vmatprep.mubr.bf16.mxu0 0
    %1295 = vmatmul.mubr.bf16.gmra.mxu0 %v1184
    %v1296 = vpop.f32.mrf.mxu0
    %v1297 = vadd.f32 0.0, %v1296
    %v1298 = vpop.f32.mrf.mxu0
    %v1299 = vpop.f32.mrf.mxu0
    %v1300 = vadd.f32 0.0, %v1299
    %v1301 = vpop.f32.mrf.mxu0
    %1302 = vmatprep.mubr.bf16.mxu0 0
    %1303 = vmatmul.mubr.bf16.gmra.mxu0 %v1183
    %v1304 = vpop.f32.mrf.mxu0
    %v1305 = vadd.f32 0.0, %v1304
    %v1306 = vpop.f32.mrf.mxu0
    %v1307 = vpop.f32.mrf.mxu0
    %v1308 = vpop.f32.mrf.mxu0
    %1309 = vdwg.mxu0
    %v1310 = vadd.f32 %v1115, %v1273
    %v1311 = vadd.f32 %v1116, %v1276
    %v1312 = vadd.f32 %v1117, %v1281
    %v1313 = vadd.f32 %v1118, %v1284
    %v1314 = vadd.f32 %v1119, %v1289
    %v1315 = vadd.f32 %v1120, %v1292
    %v1316 = vadd.f32 %v1121, %v1297
    %v1317 = vadd.f32 %v1122, %v1300
    %v1318 = vadd.f32 %v1123, %v1305
    %v1319 = vld [vmem:[#allocation2 + $0x14] sm:$0x8]
    %v1320 = vld [vmem:[#allocation2 + $0x38] sm:$0x7]
    %s1321 = scalar_lea.vmem [#allocation5], 448
    %v1322 = vld [vmem:[%s1321] sm:$0xf]
    %v1323 = vld [vmem:[%s1321 + $0x4] sm:$0xf]
    %v1324 = vld [vmem:[%s1321 + $0x8] sm:$0xf]
    %v1325 = vld [vmem:[%s1321 + $0xc] sm:$0xf]
    %v1326 = vld [vmem:[%s1321 + $0x10] sm:$0xf]
    %v1327 = vld [vmem:[%s1321 + $0x14] sm:$0xf]
    %v1328 = vld [vmem:[%s1321 + $0x18] sm:$0xf]
    %v1329 = vld [vmem:[%s1321 + $0x1c] sm:$0xf]
    %v1330 = vld [vmem:[%s1321 + $0x20] sm:$0xf]
    %v1331 = vld [vmem:[%s1321 + $0x24] sm:$0xf]
    %v1332 = vld [vmem:[%s1321 + $0x28] sm:$0xf]
    %v1333 = vld [vmem:[%s1321 + $0x2c] sm:$0xf]
    %v1334 = vld [vmem:[%s1321 + $0x30] sm:$0xf]
    %v1335 = vld [vmem:[%s1321 + $0x34] sm:$0xf]
    %v1336 = vld [vmem:[%s1321 + $0x38] sm:$0xf]
    %v1337 = vld [vmem:[%s1321 + $0x3c] sm:$0xf]
    %v1340 = vunpack.c.l.b16 %v1319
    %v1341 = vunpack.c.l.b16 %v1320
    %v1342 = vpack.c.b16 %v1162, %v1340
    %v1343 = vpack.c.b16 %v1341, %v1169
    %v1344 = vrot.slane %v1342, 3
    %v1345 = vrot.slane %v1172, 3
    %v1346 = vsel %vm626, %v1344, %v1345
    %v1347 = vrot.slane %v1173, 3
    %v1348 = vsel %vm626, %v1345, %v1347
    %v1349 = vrot.slane %v1174, 3
    %v1350 = vsel %vm626, %v1347, %v1349
    %v1351 = vrot.slane %v1343, 3
    %v1352 = vsel %vm626, %v1349, %v1351
    %v1374 = vunpack.c.l.b16 %v1322
    %v1375 = vunpack.c.l.b16 %v1323
    %v1376 = vunpack.c.l.b16 %v1324
    %v1377 = vunpack.c.l.b16 %v1325
    %v1378 = vunpack.c.l.b16 %v1326
    %v1379 = vunpack.c.l.b16 %v1327
    %v1380 = vunpack.c.l.b16 %v1328
    %v1381 = vunpack.c.l.b16 %v1329
    %v1382 = vunpack.c.l.b16 %v1330
    %v1383 = vunpack.c.l.b16 %v1331
    %v1384 = vunpack.c.l.b16 %v1332
    %v1385 = vunpack.c.l.b16 %v1333
    %v1386 = vunpack.c.l.b16 %v1334
    %v1387 = vunpack.c.l.b16 %v1335
    %v1388 = vunpack.c.l.b16 %v1336
    %v1389 = vunpack.c.l.b16 %v1337
    %v1390 = vpack.c.b16 %v1375, %v1374
    %v1391 = vpack.c.b16 %v1377, %v1376
    %v1392 = vpack.c.b16 %v1379, %v1378
    %v1393 = vpack.c.b16 %v1381, %v1380
    %v1394 = vpack.c.b16 %v1383, %v1382
    %v1395 = vpack.c.b16 %v1385, %v1384
    %v1396 = vpack.c.b16 %v1387, %v1386
    %v1397 = vpack.c.b16 %v1389, %v1388
    %1406 = vmatprep.subr.bf16.mxu0 0
    %1407 = vmatpush1.bf16.msra.mxu0 %v1397
    %1408 = vmatprep.subr.bf16.mxu0 0
    %1409 = vmatpush1.bf16.msra.mxu0 %v1396
    %1410 = vmatprep.subr.bf16.mxu0 0
    %1411 = vmatpush1.bf16.msra.mxu0 %v1395
    %1412 = vmatprep.subr.bf16.mxu0 0
    %1413 = vmatpush1.bf16.msra.mxu0 %v1394
    %1414 = vmatprep.subr.bf16.mxu0 0
    %1415 = vmatpush1.bf16.msra.mxu0 %v1393
    %1416 = vmatprep.subr.bf16.mxu0 0
    %1417 = vmatpush1.bf16.msra.mxu0 %v1392
    %1418 = vmatprep.subr.bf16.mxu0 0
    %1419 = vmatpush1.bf16.msra.mxu0 %v1391
    %1420 = vmatprep.subr.bf16.mxu0 0
    %1421 = vmatpush1.bf16.msra.mxu0 %v1390
    %1422 = vmatprep.subr.bf16.mxu0 0
    %1423 = vmatpush2.bf16.msra.mxu0 0
    %1424 = vmatprep.subr.bf16.mxu0 0
    %1425 = vmatpush2.bf16.msra.mxu0 0
    %1426 = vmatprep.subr.bf16.mxu0 0
    %1427 = vmatpush2.bf16.msra.mxu0 0
    %1428 = vmatprep.subr.bf16.mxu0 0
    %1429 = vmatpush2.bf16.msra.mxu0 0
    %1430 = vmatprep.subr.bf16.mxu0 0
    %1431 = vmatpush2.bf16.msra.mxu0 0
    %1432 = vmatprep.subr.bf16.mxu0 0
    %1433 = vmatpush2.bf16.msra.mxu0 0
    %1434 = vmatprep.subr.bf16.mxu0 0
    %1435 = vmatpush2.bf16.msra.mxu0 0
    %1436 = vmatprep.subr.bf16.mxu0 0
    %1437 = vmatpush2.bf16.msra.mxu0 0
    %1438 = vmatprep.mubr.bf16.mxu0 0
    %1439 = vmatmul.mubr.bf16.gmra.mxu0 %v1346
    %v1440 = vpop.f32.mrf.mxu0
    %v1441 = vadd.f32 0.0, %v1440
    %v1442 = vpop.f32.mrf.mxu0
    %v1443 = vpop.f32.mrf.mxu0
    %v1444 = vadd.f32 0.0, %v1443
    %v1445 = vpop.f32.mrf.mxu0
    %1446 = vmatprep.mubr.bf16.mxu0 0
    %1447 = vmatmul.mubr.bf16.gmra.mxu0 %v1348
    %v1448 = vpop.f32.mrf.mxu0
    %v1449 = vadd.f32 0.0, %v1448
    %v1450 = vpop.f32.mrf.mxu0
    %v1451 = vpop.f32.mrf.mxu0
    %v1452 = vadd.f32 0.0, %v1451
    %v1453 = vpop.f32.mrf.mxu0
    %1454 = vmatprep.mubr.bf16.mxu0 0
    %1455 = vmatmul.mubr.bf16.gmra.mxu0 %v1350
    %v1456 = vpop.f32.mrf.mxu0
    %v1457 = vadd.f32 0.0, %v1456
    %v1458 = vpop.f32.mrf.mxu0
    %v1459 = vpop.f32.mrf.mxu0
    %v1460 = vadd.f32 0.0, %v1459
    %v1461 = vpop.f32.mrf.mxu0
    %1462 = vmatprep.mubr.bf16.mxu0 0
    %1463 = vmatmul.mubr.bf16.gmra.mxu0 %v1352
    %v1464 = vpop.f32.mrf.mxu0
    %v1465 = vadd.f32 0.0, %v1464
    %v1466 = vpop.f32.mrf.mxu0
    %v1467 = vpop.f32.mrf.mxu0
    %v1468 = vadd.f32 0.0, %v1467
    %v1469 = vpop.f32.mrf.mxu0
    %1470 = vmatprep.mubr.bf16.mxu0 0
    %1471 = vmatmul.mubr.bf16.gmra.mxu0 %v1351
    %v1472 = vpop.f32.mrf.mxu0
    %v1473 = vadd.f32 0.0, %v1472
    %v1474 = vpop.f32.mrf.mxu0
    %v1475 = vpop.f32.mrf.mxu0
    %v1476 = vpop.f32.mrf.mxu0
    %1477 = vdwg.mxu0
    %v1478 = vadd.f32 %v1310, %v1441
    %v1479 = vadd.f32 %v1311, %v1444
    %v1480 = vadd.f32 %v1312, %v1449
    %v1481 = vadd.f32 %v1313, %v1452
    %v1482 = vadd.f32 %v1314, %v1457
    %v1483 = vadd.f32 %v1315, %v1460
    %v1484 = vadd.f32 %v1316, %v1465
    %v1485 = vadd.f32 %v1317, %v1468
    %v1486 = vadd.f32 %v1318, %v1473
    %v1487 = vld [vmem:[#allocation2 + $0x38] sm:$0xf]
    %s1488 = scalar_lea.vmem [#allocation5], 512
    %v1489 = vld [vmem:[%s1488] sm:$0xf]
    %v1490 = vld [vmem:[%s1488 + $0x4] sm:$0xf]
    %v1491 = vld [vmem:[%s1488 + $0x8] sm:$0xf]
    %v1492 = vld [vmem:[%s1488 + $0xc] sm:$0xf]
    %v1493 = vld [vmem:[%s1488 + $0x10] sm:$0xf]
    %v1494 = vld [vmem:[%s1488 + $0x14] sm:$0xf]
    %v1495 = vld [vmem:[%s1488 + $0x18] sm:$0xf]
    %v1496 = vld [vmem:[%s1488 + $0x1c] sm:$0xf]
    %v1497 = vld [vmem:[%s1488 + $0x20] sm:$0xf]
    %v1498 = vld [vmem:[%s1488 + $0x24] sm:$0xf]
    %v1499 = vld [vmem:[%s1488 + $0x28] sm:$0xf]
    %v1500 = vld [vmem:[%s1488 + $0x2c] sm:$0xf]
    %v1501 = vld [vmem:[%s1488 + $0x30] sm:$0xf]
    %v1502 = vld [vmem:[%s1488 + $0x34] sm:$0xf]
    %v1503 = vld [vmem:[%s1488 + $0x38] sm:$0xf]
    %v1504 = vld [vmem:[%s1488 + $0x3c] sm:$0xf]
    %v1506 = vunpack.c.l.b16 %v1487
    %v1507 = vpack.c.b16 %v1163, %v1162
    %v1508 = vpack.c.b16 %v1165, %v1164
    %v1509 = vpack.c.b16 %v1167, %v1166
    %v1510 = vpack.c.b16 %v1169, %v1168
    %v1511 = vpack.c.b16 %v1506, %v1506
    %v1533 = vunpack.c.l.b16 %v1489
    %v1534 = vunpack.c.l.b16 %v1490
    %v1535 = vunpack.c.l.b16 %v1491
    %v1536 = vunpack.c.l.b16 %v1492
    %v1537 = vunpack.c.l.b16 %v1493
    %v1538 = vunpack.c.l.b16 %v1494
    %v1539 = vunpack.c.l.b16 %v1495
    %v1540 = vunpack.c.l.b16 %v1496
    %v1541 = vunpack.c.l.b16 %v1497
    %v1542 = vunpack.c.l.b16 %v1498
    %v1543 = vunpack.c.l.b16 %v1499
    %v1544 = vunpack.c.l.b16 %v1500
    %v1545 = vunpack.c.l.b16 %v1501
    %v1546 = vunpack.c.l.b16 %v1502
    %v1547 = vunpack.c.l.b16 %v1503
    %v1548 = vunpack.c.l.b16 %v1504
    %v1549 = vpack.c.b16 %v1534, %v1533
    %v1550 = vpack.c.b16 %v1536, %v1535
    %v1551 = vpack.c.b16 %v1538, %v1537
    %v1552 = vpack.c.b16 %v1540, %v1539
    %v1553 = vpack.c.b16 %v1542, %v1541
    %v1554 = vpack.c.b16 %v1544, %v1543
    %v1555 = vpack.c.b16 %v1546, %v1545
    %v1556 = vpack.c.b16 %v1548, %v1547
    %1565 = vmatprep.subr.bf16.mxu0 0
    %1566 = vmatpush1.bf16.msra.mxu0 %v1556
    %1567 = vmatprep.subr.bf16.mxu0 0
    %1568 = vmatpush1.bf16.msra.mxu0 %v1555
    %1569 = vmatprep.subr.bf16.mxu0 0
    %1570 = vmatpush1.bf16.msra.mxu0 %v1554
    %1571 = vmatprep.subr.bf16.mxu0 0
    %1572 = vmatpush1.bf16.msra.mxu0 %v1553
    %1573 = vmatprep.subr.bf16.mxu0 0
    %1574 = vmatpush1.bf16.msra.mxu0 %v1552
    %1575 = vmatprep.subr.bf16.mxu0 0
    %1576 = vmatpush1.bf16.msra.mxu0 %v1551
    %1577 = vmatprep.subr.bf16.mxu0 0
    %1578 = vmatpush1.bf16.msra.mxu0 %v1550
    %1579 = vmatprep.subr.bf16.mxu0 0
    %1580 = vmatpush1.bf16.msra.mxu0 %v1549
    %1581 = vmatprep.subr.bf16.mxu0 0
    %1582 = vmatpush2.bf16.msra.mxu0 0
    %1583 = vmatprep.subr.bf16.mxu0 0
    %1584 = vmatpush2.bf16.msra.mxu0 0
    %1585 = vmatprep.subr.bf16.mxu0 0
    %1586 = vmatpush2.bf16.msra.mxu0 0
    %1587 = vmatprep.subr.bf16.mxu0 0
    %1588 = vmatpush2.bf16.msra.mxu0 0
    %1589 = vmatprep.subr.bf16.mxu0 0
    %1590 = vmatpush2.bf16.msra.mxu0 0
    %1591 = vmatprep.subr.bf16.mxu0 0
    %1592 = vmatpush2.bf16.msra.mxu0 0
    %1593 = vmatprep.subr.bf16.mxu0 0
    %1594 = vmatpush2.bf16.msra.mxu0 0
    %1595 = vmatprep.subr.bf16.mxu0 0
    %1596 = vmatpush2.bf16.msra.mxu0 0
    %1597 = vmatprep.mubr.bf16.mxu0 0
    %1598 = vmatmul.mubr.bf16.gmra.mxu0 %v1507
    %v1599 = vpop.f32.mrf.mxu0
    %v1600 = vadd.f32 0.0, %v1599
    %v1601 = vpop.f32.mrf.mxu0
    %v1602 = vpop.f32.mrf.mxu0
    %v1603 = vadd.f32 0.0, %v1602
    %v1604 = vpop.f32.mrf.mxu0
    %1605 = vmatprep.mubr.bf16.mxu0 0
    %1606 = vmatmul.mubr.bf16.gmra.mxu0 %v1508
    %v1607 = vpop.f32.mrf.mxu0
    %v1608 = vadd.f32 0.0, %v1607
    %v1609 = vpop.f32.mrf.mxu0
    %v1610 = vpop.f32.mrf.mxu0
    %v1611 = vadd.f32 0.0, %v1610
    %v1612 = vpop.f32.mrf.mxu0
    %1613 = vmatprep.mubr.bf16.mxu0 0
    %1614 = vmatmul.mubr.bf16.gmra.mxu0 %v1509
    %v1615 = vpop.f32.mrf.mxu0
    %v1616 = vadd.f32 0.0, %v1615
    %v1617 = vpop.f32.mrf.mxu0
    %v1618 = vpop.f32.mrf.mxu0
    %v1619 = vadd.f32 0.0, %v1618
    %v1620 = vpop.f32.mrf.mxu0
    %1621 = vmatprep.mubr.bf16.mxu0 0
    %1622 = vmatmul.mubr.bf16.gmra.mxu0 %v1510
    %v1623 = vpop.f32.mrf.mxu0
    %v1624 = vadd.f32 0.0, %v1623
    %v1625 = vpop.f32.mrf.mxu0
    %v1626 = vpop.f32.mrf.mxu0
    %v1627 = vadd.f32 0.0, %v1626
    %v1628 = vpop.f32.mrf.mxu0
    %1629 = vmatprep.mubr.bf16.mxu0 0
    %1630 = vmatmul.mubr.bf16.gmra.mxu0 %v1511
    %v1631 = vpop.f32.mrf.mxu0
    %v1632 = vadd.f32 0.0, %v1631
    %v1633 = vpop.f32.mrf.mxu0
    %v1634 = vpop.f32.mrf.mxu0
    %v1635 = vpop.f32.mrf.mxu0
    %1636 = vdwg.mxu0
    %v1637 = vadd.f32 %v1478, %v1600
    %v1638 = vadd.f32 %v1479, %v1603
    %v1639 = vadd.f32 %v1480, %v1608
    %v1640 = vadd.f32 %v1481, %v1611
    %v1641 = vadd.f32 %v1482, %v1616
    %v1642 = vadd.f32 %v1483, %v1619
    %v1643 = vadd.f32 %v1484, %v1624
    %v1644 = vadd.f32 %v1485, %v1627
    %v1645 = vadd.f32 %v1486, %v1632
    %v1646 = vld [vmem:[#allocation7] sm:$0xff]
    %v1647 = vlaneseq
    %v1648 = vshrl.u32 %v1647, 7
    %v1649 = vsub.s32 0, %v1648
    %v1650 = vrot.slane %v1646, %v1649
    %v1651 = vadd.f32 %v1637, %v1650
    %v1652 = vadd.f32 %v1638, %v1650
    %v1653 = vadd.f32 %v1639, %v1650
    %v1654 = vadd.f32 %v1640, %v1650
    %v1655 = vadd.f32 %v1641, %v1650
    %v1656 = vadd.f32 %v1642, %v1650
    %v1657 = vadd.f32 %v1643, %v1650
    %v1658 = vadd.f32 %v1644, %v1650
    %v1659 = vadd.f32 %v1645, %v1650
    %vm1660 = vcmp.gt.f32.partialorder %v1651, 0.0
    %vm1661 = vcmp.gt.f32.partialorder %v1652, 0.0
    %vm1662 = vcmp.gt.f32.partialorder %v1653, 0.0
    %vm1663 = vcmp.gt.f32.partialorder %v1654, 0.0
    %vm1664 = vcmp.gt.f32.partialorder %v1655, 0.0
    %vm1665 = vcmp.gt.f32.partialorder %v1656, 0.0
    %vm1666 = vcmp.gt.f32.partialorder %v1657, 0.0
    %vm1667 = vcmp.gt.f32.partialorder %v1658, 0.0
    %vm1668 = vcmp.gt.f32.partialorder %v1659, 0.0
    %v1669 = vmul.f32 %v1651, 0.01
    %v1670 = vmul.f32 %v1652, 0.01
    %v1671 = vmul.f32 %v1653, 0.01
    %v1672 = vmul.f32 %v1654, 0.01
    %v1673 = vmul.f32 %v1655, 0.01
    %v1674 = vmul.f32 %v1656, 0.01
    %v1675 = vmul.f32 %v1657, 0.01
    %v1676 = vmul.f32 %v1658, 0.01
    %v1677 = vmul.f32 %v1659, 0.01
    %v1678 = vsel %vm1660, %v1651, %v1669
    %v1679 = vsel %vm1661, %v1652, %v1670
    %v1680 = vsel %vm1662, %v1653, %v1671
    %v1681 = vsel %vm1663, %v1654, %v1672
    %v1682 = vsel %vm1664, %v1655, %v1673
    %v1683 = vsel %vm1665, %v1656, %v1674
    %v1684 = vsel %vm1666, %v1657, %v1675
    %v1685 = vsel %vm1667, %v1658, %v1676
    %v1686 = vsel %vm1668, %v1659, %v1677
    %v1687 = vlaneseq
    %v1688 = vshrl.u32 %v1687, 7
    %v1689 = vsub.s32 1, %v1688
    %v1690 = vrot.slane %v1646, %v1689
    %v1691 = vmul.f32 %v1678, %v1690
    %v1692 = vmul.f32 %v1679, %v1690
    %v1693 = vmul.f32 %v1680, %v1690
    %v1694 = vmul.f32 %v1681, %v1690
    %v1695 = vmul.f32 %v1682, %v1690
    %v1696 = vmul.f32 %v1683, %v1690
    %v1697 = vmul.f32 %v1684, %v1690
    %v1698 = vmul.f32 %v1685, %v1690
    %v1699 = vmul.f32 %v1686, %v1690
    %v1700 = vlaneseq
    %v1701 = vshrl.u32 %v1700, 7
    %v1702 = vsub.s32 2, %v1701
    %v1703 = vrot.slane %v1646, %v1702
    %v1704 = vadd.f32 %v1691, %v1703
    %v1705 = vadd.f32 %v1692, %v1703
    %v1706 = vadd.f32 %v1693, %v1703
    %v1707 = vadd.f32 %v1694, %v1703
    %v1708 = vadd.f32 %v1695, %v1703
    %v1709 = vadd.f32 %v1696, %v1703
    %v1710 = vadd.f32 %v1697, %v1703
    %v1711 = vadd.f32 %v1698, %v1703
    %v1712 = vadd.f32 %v1699, %v1703
    %v1713 = vld [vmem:[#allocation8] sm:$0xf]
    %v1714 = vld [vmem:[#allocation8 + $0x4] sm:$0xf]
    %v1715 = vld [vmem:[#allocation8 + $0x8] sm:$0xf]
    %v1716 = vld [vmem:[#allocation8 + $0xc] sm:$0xf]
    %v1717 = vld [vmem:[#allocation8 + $0x10] sm:$0xf]
    %v1718 = vld [vmem:[#allocation8 + $0x14] sm:$0xf]
    %v1719 = vld [vmem:[#allocation8 + $0x18] sm:$0xf]
    %v1720 = vld [vmem:[#allocation8 + $0x1c] sm:$0xf]
    %v1721 = vld [vmem:[#allocation8 + $0x20] sm:$0xf]
    %v1722 = vunpack.c.l.bf16 %v1713
    %v1723 = vunpack.c.l.bf16 %v1714
    %v1724 = vunpack.c.l.bf16 %v1715
    %v1725 = vunpack.c.l.bf16 %v1716
    %v1726 = vunpack.c.l.bf16 %v1717
    %v1727 = vunpack.c.l.bf16 %v1718
    %v1728 = vunpack.c.l.bf16 %v1719
    %v1729 = vunpack.c.l.bf16 %v1720
    %v1730 = vunpack.c.l.bf16 %v1721
    %v1731 = vadd.f32 %v1704, %v1722
    %v1732 = vadd.f32 %v1705, %v1723
    %v1733 = vadd.f32 %v1706, %v1724
    %v1734 = vadd.f32 %v1707, %v1725
    %v1735 = vadd.f32 %v1708, %v1726
    %v1736 = vadd.f32 %v1709, %v1727
    %v1737 = vadd.f32 %v1710, %v1728
    %v1738 = vadd.f32 %v1711, %v1729
    %v1739 = vadd.f32 %v1712, %v1730
    %v1740 = vpack.c.bf16 %v1732, %v1731
    %v1741 = vpack.c.bf16 %v1734, %v1733
    %v1742 = vpack.c.bf16 %v1736, %v1735
    %v1743 = vpack.c.bf16 %v1738, %v1737
    %v1744 = vpack.c.bf16 %v1739, %v1739
    %v1750 = vunpack.c.l.b16 %v1740
    %v1751 = vunpack.c.h.b16 %v1740
    %v1752 = vunpack.c.l.b16 %v1741
    %v1753 = vunpack.c.h.b16 %v1741
    %v1754 = vunpack.c.l.b16 %v1742
    %v1755 = vunpack.c.h.b16 %v1742
    %v1756 = vunpack.c.l.b16 %v1743
    %v1757 = vunpack.c.h.b16 %v1743
    %v1758 = vunpack.c.l.b16 %v1744
    %v1759 = vpack.c.b16 %v1750, %v1750
    %v1760 = vpack.c.b16 %v1751, %v1751
    %v1761 = vpack.c.b16 %v1752, %v1752
    %v1762 = vpack.c.b16 %v1753, %v1753
    %v1763 = vpack.c.b16 %v1754, %v1754
    %v1764 = vpack.c.b16 %v1755, %v1755
    %v1765 = vpack.c.b16 %v1756, %v1756
    %v1766 = vpack.c.b16 %v1757, %v1757
    %v1767 = vpack.c.b16 %v1758, %v1758
    %1777 = vst [vmem:[#allocation10] sm:$0xf] %v1759
    %1778 = vst [vmem:[#allocation10 + $0x4] sm:$0xf] %v1760
    %1779 = vst [vmem:[#allocation10 + $0x8] sm:$0xf] %v1761
    %1780 = vst [vmem:[#allocation10 + $0xc] sm:$0xf] %v1762
    %1781 = vst [vmem:[#allocation10 + $0x10] sm:$0xf] %v1763
    %1782 = vst [vmem:[#allocation10 + $0x14] sm:$0xf] %v1764
    %1783 = vst [vmem:[#allocation10 + $0x18] sm:$0xf] %v1765
    %1784 = vst [vmem:[#allocation10 + $0x1c] sm:$0xf] %v1766
    %1785 = vst [vmem:[#allocation10 + $0x20] sm:$0xf] %v1767
    // Predicated region
    $region34: #{tpu_custom_call.1} parent=1 // pred_check
      _
    $region35: #{tpu_custom_call.1} parent=1 // pred_check_branch
      %1787 = sbr.rel (0) target = $region37
    $region36: #{tpu_custom_call.1} parent=1 // pred_region
      %s1789 = ssub.s32 576, 576
      %1790 = vsyncadd [#allocation4], %s1789
      %s1791 = sshll.u32 [#allocation10], 4
      %s1792 = int_to_ptr.vmem [resolvable:$true] %s1791
      %1797 = dma.vmem_to_hbm [thread:$0]  %s1792, 576, %s4, [#allocation4], 64, 64, 4
    $region37: #{tpu_custom_call.1} parent=1 // pred_fallthru
      _
    // Predicated region
    $region38: #{tpu_custom_call.1} parent=1 // pred_check
      _
    $region39: #{tpu_custom_call.1} parent=1 // pred_check_branch
      %1799 = sbr.rel (0) target = $region41
    $region40: #{tpu_custom_call.1} parent=1 // pred_region
      %1800 = dma.done [#allocation4], 576
    $region41: #{tpu_custom_call.1} parent=1 // pred_fallthru
      _
    %1801 = vsyncpa [#allocation3], 1
    %1802 = vsyncpa [#allocation6], 1
    %1803 = vsyncpa [#allocation9], 1
    %1804 = vsyncpa [#allocation4], 1

</llo_original>
